<compile_context>
chip_gen: v5e
topology: v5e:2x2
jax: 0.10.0
libtpu: 0.0.40
codegen_flags: <defaults>
</compile_context>

<pallas_src>
import functools

import jax
import jax.numpy as jnp
import numpy as np
from jax import lax
from jax.experimental import pallas as pl
from jax.experimental.pallas import tpu as pltpu


# --------------------------------------------------------------------------- helpers

@functools.lru_cache(maxsize=None)
def _bitcast_low_first() -> bool:
    """lax.bitcast_convert_type 32b -> 16b convention: True if the new minor index 0
    holds the LOW 16 bits (little-endian, the expected case).  Probed once so the
    in-kernel packing always matches the wrapper-side reinterpretation."""
    probe = np.asarray(jax.lax.bitcast_convert_type(jnp.uint32(1), jnp.uint16))
    return bool(probe[0] == 1)


def _vmem_budget():
    """(per-step working-set budget, scoped vmem limit) in bytes, from real VMEM size."""
    try:
        cap = int(pltpu.get_tpu_info().vmem_capacity_bytes)
    except Exception:
        cap = 64 * 1024 * 1024          # conservative (v7x-sized) fallback
    budget = min(int(cap * 0.35), 56 * 1024 * 1024)
    limit = min(int(cap * 0.75), 100 * 1024 * 1024)
    return budget, limit


def _pick_tile_flat(hw, per_px_bytes, budget):
    """Largest multiple-of-128 tile dividing hw whose per-step footprint fits budget."""
    if hw % 128 != 0:                    # caller pads; kept as a guard
        return hw
    cap = max(128, min(hw, (budget // max(per_px_bytes, 1)) // 128 * 128))
    t = cap
    while hw % t:
        t -= 128
    return t


def _pick_rows(h, w, cin, cout, budget):
    """Rows-per-tile for the fused pass 2 (tile = rows*W pixels).

    Per input pixel per step: 2 x bf16 x buffers (4*Cin B), 2 x uint32 out buffers
    (8*Cout B), f32 matmul/normalize/pack temporaries (~32*Cout B).
    rows must divide H and be a multiple of 8 (or equal H) for the out BlockSpec."""
    per_px = 4 * cin + 40 * cout
    max_rows = max(1, (budget // per_px) // w)
    if h <= max_rows:
        return h
    best = None
    r = 8
    while r <= max_rows:
        if h % r == 0:
            best = r
        r += 8
    return best                          # None -> caller falls back to the planar path


# --------------------------------------------------------------------------- kernels

def _stats_kernel(x_ref, w_ref, stats_ref, g_ref, s_ref, *, total_px, eps):
    """Pass 1: accumulate Gram matrix / pixel sums of x; finalize to per-channel
    InstanceNorm (scale, shift) = (rstd, -mean*rstd)."""
    t = pl.program_id(1)

    @pl.when(t == 0)
    def _init():
        g_ref[...] = jnp.zeros_like(g_ref)
        s_ref[...] = jnp.zeros_like(s_ref)

    x = x_ref[0]                                                  # (Cin, tile) bf16
    # G += x @ x^T (contract the pixel axis of both operands), s += row sums.
    g_ref[...] += lax.dot_general(x, x, (((1,), (1,)), ((), ())),
                                  preferred_element_type=jnp.float32)
    s_ref[...] += jnp.sum(x.astype(jnp.float32), axis=1, keepdims=True)

    @pl.when(t == pl.num_programs(1) - 1)
    def _finalize():
        w = w_ref[...]                                            # (4*Cout, Cin) f32
        g = g_ref[...]                                            # (Cin, Cin)
        s = s_ref[...]                                            # (Cin, 1)
        row_sum = jnp.dot(w, s, preferred_element_type=jnp.float32)   # (4*Cout, 1)
        wg = jnp.dot(w, g, preferred_element_type=jnp.float32)        # (4*Cout, Cin)
        row_sq = jnp.sum(wg * w, axis=1, keepdims=True)               # (4*Cout, 1)
        cout = stats_ref.shape[1]
        # Fold the 4 tap rows (k*Cout + c, k = 0..3) of every channel.
        s_c = row_sum[0:cout] + row_sum[cout:2 * cout] + row_sum[2 * cout:3 * cout] + row_sum[3 * cout:]
        q_c = row_sq[0:cout] + row_sq[cout:2 * cout] + row_sq[2 * cout:3 * cout] + row_sq[3 * cout:]
        denom = 4.0 * total_px
        mean = s_c / denom
        var = jnp.maximum(q_c / denom - mean * mean, 0.0)         # biased variance
        rstd = lax.rsqrt(var + eps)
        stats_ref[0] = jnp.concatenate([rstd, -mean * rstd], axis=1)   # (Cout, 2)


def _fused_norm_kernel(stats_ref, x_ref, w_ref, o_ref, *, neg_slope, low_first):
    """Pass 2 (fused): conv taps for one kh, normalize + LeakyReLU in f32, pack the two
    kw taps of every pixel into one uint32 lane and store the final-layout block."""
    x = x_ref[0]                                                  # (Cin, rows*W) bf16
    w = w_ref[0]                                                  # (2*Cout, Cin) bf16
    y = jnp.dot(w, x, preferred_element_type=jnp.float32)         # (2*Cout, rows*W)
    st = stats_ref[0]                                             # (Cout, 2) f32
    scale, shift = st[:, 0:1], st[:, 1:2]
    cout = st.shape[0]

    def norm_act(v):                                              # keep elementwise in f32
        v = v * scale + shift
        return jnp.where(v >= 0, v, neg_slope * v)

    z_even = norm_act(y[:cout])                                   # kw = 0 -> output col 2w
    z_odd = norm_act(y[cout:])                                    # kw = 1 -> output col 2w+1
    lo, hi = (z_even, z_odd) if low_first else (z_odd, z_even)
    # bf16(v) bits are the top half of f32(bf16(v)); build the packed uint32 per lane.
    lo_bits = pltpu.bitcast(lo.astype(jnp.bfloat16).astype(jnp.float32), jnp.uint32) >> 16
    hi_bits = pltpu.bitcast(hi.astype(jnp.bfloat16).astype(jnp.float32), jnp.uint32)
    packed = hi_bits | lo_bits                                    # (Cout, rows*W) uint32
    o_ref[0] = packed.reshape(o_ref.shape[1:])                    # (Cout, rows, W)


def _planar_norm_kernel(stats_ref, x_ref, w_ref, o_ref, *, neg_slope):
    """Pass 2 (planar fallback): conv tile for all 4 taps + fused normalize/LeakyReLU."""
    x = x_ref[0]                                                  # (Cin, tile) bf16
    w = w_ref[...]                                                # (4*Cout, Cin) bf16
    y = jnp.dot(w, x, preferred_element_type=jnp.float32)         # (4*Cout, tile)
    st = stats_ref[0]                                             # (Cout, 2)
    scale = jnp.concatenate([st[:, 0:1]] * 4, axis=0)
    shift = jnp.concatenate([st[:, 1:2]] * 4, axis=0)
    z = y * scale + shift
    z = jnp.where(z >= 0, z, neg_slope * z)
    o_ref[0] = z.astype(o_ref.dtype)


# --------------------------------------------------------------------------- wrapper

def transpose_conv_block(x_nchw, weight, *, eps=1e-5, neg_slope=0.2,
                         out_dtype=jnp.bfloat16, fuse_output=None):
    """Forward of TransposeConvBlock (dims=2).

    x_nchw : (N, Cin, H, W)
    weight : (Cin, Cout, 2, 2)     nn.ConvTranspose2d weight layout
    returns: (N, Cout, 2H, 2W) in `out_dtype`

    out_dtype=bfloat16 + W % 128 == 0 selects the fully fused output path (no XLA tap
    transpose).  Other cases use the planar fallback path.
    """
    N, Cin, H, W = x_nchw.shape
    Cout = weight.shape[1]
    C4 = 4 * Cout
    HW = H * W
    budget, vmem_limit = _vmem_budget()

    # Fused tap weight: row (2*kh + kw)*Cout + c = weight[ci, c, kh, kw]  (tiny op).
    w_taps = jnp.transpose(weight, (2, 3, 1, 0)).reshape(C4, Cin).astype(jnp.float32)

    # bf16 HBM streaming of x (halves in-kernel x traffic / VMEM and guarantees the
    # single-pass MXU path; the cast fuses into x's producer in an end-to-end model).
    x_flat = x_nchw.reshape(N, Cin, HW).astype(jnp.bfloat16)

    # Guard unaligned spatial sizes: zero-pad the pixel axis to a lane multiple (zeros do
    # not perturb the Gram/sum statistics; padded planar output columns are sliced off).
    HWp = HW if HW % 128 == 0 else ((HW + 127) // 128) * 128
    if HWp != HW:
        x_flat = jnp.pad(x_flat, ((0, 0), (0, 0), (0, HWp - HW)))

    # ---- pass 1: per-(sample, channel) InstanceNorm statistics ----
    tile1 = _pick_tile_flat(HWp, 8 * Cin + 64, budget)
    stats = pl.pallas_call(
        functools.partial(_stats_kernel, total_px=HW, eps=eps),
        out_shape=jax.ShapeDtypeStruct((N, Cout, 2), jnp.float32),
        grid=(N, HWp // tile1),
        in_specs=[
            pl.BlockSpec((1, Cin, tile1), lambda n, t: (n, 0, t)),
            pl.BlockSpec((C4, Cin), lambda n, t: (0, 0)),
        ],
        out_specs=pl.BlockSpec((1, Cout, 2), lambda n, t: (n, 0, 0)),
        scratch_shapes=[pltpu.VMEM((Cin, Cin), jnp.float32),
                        pltpu.VMEM((Cin, 1), jnp.float32)],
        compiler_params=pltpu.CompilerParams(
            dimension_semantics=("parallel", "arbitrary"),
            vmem_limit_bytes=vmem_limit),
    )(x_flat, w_taps)

    rows = _pick_rows(H, W, Cin, Cout, budget) if W % 128 == 0 else None
    if fuse_output is None:
        fuse_output = (np.dtype(out_dtype) == np.dtype(jnp.bfloat16)) and rows is not None

    if fuse_output:
        # ---- pass 2 (fused): conv + normalize + LeakyReLU + tap interleave ----
        assert rows is not None and np.dtype(out_dtype) == np.dtype(jnp.bfloat16)
        tile2 = rows * W
        w_kh = w_taps.reshape(2, 2 * Cout, Cin).astype(jnp.bfloat16)   # [kh, kw*Cout+c, ci]
        low_first = _bitcast_low_first()
        # Output viewed as (N, Cout, H, 2W) uint32: byte-identical to the final
        # (N, Cout, 2H, 2W) bf16 tensor (last axis = (kh, packed kw-pairs)).
        out_u32 = pl.pallas_call(
            functools.partial(_fused_norm_kernel, neg_slope=neg_slope, low_first=low_first),
            out_shape=jax.ShapeDtypeStruct((N, Cout, H, 2 * W), jnp.uint32),
            grid=(N, H // rows, 2),                                 # kh innermost: x reused
            in_specs=[
                pl.BlockSpec((1, Cout, 2), lambda n, t, kh: (n, 0, 0)),
                pl.BlockSpec((1, Cin, tile2), lambda n, t, kh: (n, 0, t)),
                pl.BlockSpec((1, 2 * Cout, Cin), lambda n, t, kh: (kh, 0, 0)),
            ],
            out_specs=pl.BlockSpec((1, Cout, rows, W), lambda n, t, kh: (n, 0, t, kh)),
            compiler_params=pltpu.CompilerParams(
                dimension_semantics=("parallel", "parallel", "arbitrary"),
                vmem_limit_bytes=vmem_limit),
        )(stats, x_flat, w_kh)
        # Pure reinterpretation of the same bytes (cheap; no tap transpose remains).
        out = lax.bitcast_convert_type(out_u32, jnp.bfloat16)      # (N, Cout, H, 2W, 2)
        return out.reshape(N, Cout, 2 * H, 2 * W)

    # ---- pass 2 (planar fallback): tap-planar output + XLA interleave ----
    out_bytes = np.dtype(out_dtype).itemsize
    tile2 = _pick_tile_flat(HWp, 4 * Cin + 8 * C4 * out_bytes + 40 * Cout, budget)
    w_bf = w_taps.astype(jnp.bfloat16)
    y = pl.pallas_call(
        functools.partial(_planar_norm_kernel, neg_slope=neg_slope),
        out_shape=jax.ShapeDtypeStruct((N, C4, HWp), out_dtype),
        grid=(N, HWp // tile2),
        in_specs=[
            pl.BlockSpec((1, Cout, 2), lambda n, t: (n, 0, 0)),
            pl.BlockSpec((1, Cin, tile2), lambda n, t: (n, 0, t)),
            pl.BlockSpec((C4, Cin), lambda n, t: (0, 0)),
        ],
        out_specs=pl.BlockSpec((1, C4, tile2), lambda n, t: (n, 0, t)),
        compiler_params=pltpu.CompilerParams(
            dimension_semantics=("parallel", "parallel"),
            vmem_limit_bytes=vmem_limit),
    )(stats, x_flat, w_bf)
    if HWp != HW:
        y = y[:, :, :HW]
    # Interleave taps back to NCHW (the extra HBM pass the fused path avoids).
    y = y.reshape(N, 2, 2, Cout, H, W)
    y = jnp.transpose(y, (0, 3, 4, 1, 5, 2))                      # (N, Cout, H, kh, W, kw)
    return y.reshape(N, Cout, 2 * H, 2 * W)


# --------------------------------------------------------------------------- reference

def _reference(x_nchw, weight, *, eps=1e-5, neg_slope=0.2):
    """Pure-JAX reference of the same forward (correctness check)."""
    N, Cin, H, W = x_nchw.shape
    Cout = weight.shape[1]
    y = jnp.einsum("nchw,cdij->ndhiwj", x_nchw, weight,
                   precision=lax.Precision.HIGHEST).reshape(N, Cout, 2 * H, 2 * W)
    mean = y.mean(axis=(2, 3), keepdims=True)
    var = y.var(axis=(2, 3), keepdims=True)                       # biased, like InstanceNorm
    z = (y - mean) / jnp.sqrt(var + eps)
    return jnp.where(z >= 0, z, neg_slope * z)


if __name__ == "__main__":
    key = jax.random.PRNGKey(0)
    kx, kw_key, kx2 = jax.random.split(key, 3)

    # nn.ConvTranspose2d(in_chans=4, out_chans=8, kernel_size=2) weight: (Cin, Cout, 2, 2)
    Cin, Cout = 4, 8
    weight = jax.random.normal(kw_key, (Cin, Cout, 2, 2), dtype=jnp.float32) * 0.1

    # --- primary: fused bf16-output path (lane-aligned width) ---
    N, H, W = 2, 8, 128
    x = jax.random.normal(kx, (N, Cin, H, W), dtype=jnp.float32)
    ref = _reference(x, weight)
    try:
        out = jax.block_until_ready(transpose_conv_block(x, weight))          # bf16, fused
    except Exception:
        # TODO(synk): toolchains without the uint32-pack/bitcast lowering fall back here.
        out = jax.block_until_ready(
            transpose_conv_block(x, weight, out_dtype=jnp.float32, fuse_output=False))
    assert out.shape == (N, Cout, 2 * H, 2 * W)
    np.testing.assert_allclose(np.asarray(jnp.asarray(out, jnp.float32)),
                               np.asarray(ref), rtol=3e-2, atol=3e-2)

    # --- fallback: planar f32-output path (small 16x16 spatial) ---
    N2, H2, W2 = 2, 16, 16
    x2 = jax.random.normal(kx2, (N2, Cin, H2, W2), dtype=jnp.float32)
    ref2 = _reference(x2, weight)
    out2 = jax.block_until_ready(
        transpose_conv_block(x2, weight, out_dtype=jnp.float32))
    assert out2.shape == (N2, Cout, 2 * H2, 2 * W2)
    np.testing.assert_allclose(np.asarray(out2), np.asarray(ref2), rtol=2e-2, atol=2e-2)

    print("KERNEL_OK")
</pallas_src>

<mosaic_0001>
module attributes {stable_mosaic.version = 11 : i64} {
  func.func @_stats_kernel(%arg0: i32, %arg1: i32, %arg2: memref<1x4x1024xbf16, #tpu.memory_space<vmem>>, %arg3: memref<32x4xf32, #tpu.memory_space<vmem>>, %arg4: memref<1x8x2xf32, #tpu.memory_space<vmem>>, %arg5: memref<4x4xf32, #tpu.memory_space<vmem>>, %arg6: memref<4x1xf32, #tpu.memory_space<vmem>>) attributes {dimension_semantics = [#tpu.dimension_semantics<parallel>, #tpu.dimension_semantics<arbitrary>], iteration_bounds = array<i64: 2, 1>, scalar_prefetch = 0 : i64, scratch_operands = 2 : i64, tpu.core_type = #tpu.core_type<tc>, window_params = [{transform_indices = @transform_0, window_bounds = array<i64: 1, 4, 1024>}, {pipeline_mode = #tpu.pipeline_mode<synchronous>, transform_indices = @transform_1, window_bounds = array<i64: 32, 4>}, {transform_indices = @transform_2, window_bounds = array<i64: 1, 8, 2>}]} {
    %c0_i32 = arith.constant 0 : i32
    %0 = arith.cmpi eq, %arg1, %c0_i32 : i32
    %1 = arith.extui %0 : i1 to i32
    %c0_i32_0 = arith.constant 0 : i32
    %2 = arith.cmpi ne, %1, %c0_i32_0 : i32
    scf.if %2 {
      %cst_14 = arith.constant 0.000000e+00 : f32
      %18 = vector.broadcast %cst_14 : f32 to vector<4x4xf32>
      %c0_15 = arith.constant 0 : index
      %c0_16 = arith.constant 0 : index
      %19 = vector.load %arg5[%c0_15, %c0_16] : memref<4x4xf32, #tpu.memory_space<vmem>>, vector<4x4xf32>
      tpu.vector_store %arg5[%c0_15, %c0_16], %18 {strides = array<i32>} : memref<4x4xf32, #tpu.memory_space<vmem>>, vector<4x4xf32>,
      %cst_17 = arith.constant 0.000000e+00 : f32
      %20 = vector.broadcast %cst_17 : f32 to vector<4x1xf32>
      %c0_18 = arith.constant 0 : index
      %c0_19 = arith.constant 0 : index
      %21 = vector.load %arg6[%c0_18, %c0_19] : memref<4x1xf32, #tpu.memory_space<vmem>>, vector<4x1xf32>
      tpu.vector_store %arg6[%c0_18, %c0_19], %20 {strides = array<i32>} : memref<4x1xf32, #tpu.memory_space<vmem>>, vector<4x1xf32>,
    } else {
    }
    %c0 = arith.constant 0 : index
    %c0_1 = arith.constant 0 : index
    %c0_2 = arith.constant 0 : index
    %3 = vector.load %arg2[%c0, %c0_1, %c0_2] : memref<1x4x1024xbf16, #tpu.memory_space<vmem>>, vector<1x4x1024xbf16>
    %4 = vector.shape_cast %3 : vector<1x4x1024xbf16> to vector<4x1024xbf16>
    %c0_3 = arith.constant 0 : index
    %c0_4 = arith.constant 0 : index
    %5 = vector.load %arg5[%c0_3, %c0_4] : memref<4x4xf32, #tpu.memory_space<vmem>>, vector<4x4xf32>
    %cst = arith.constant dense<0.000000e+00> : vector<4x4xf32>
    %6 = tpu.matmul %4, %4, %cst {dimension_numbers = #tpu.dot_dimension_numbers<[1], [1], [0], [0], [0, 0, 1, 0], [], []>} : vector<4x1024xbf16>, vector<4x1024xbf16>, vector<4x4xf32> -> vector<4x4xf32>
    %7 = arith.addf %5, %6 : vector<4x4xf32>
    %c0_5 = arith.constant 0 : index
    %c0_6 = arith.constant 0 : index
    %8 = vector.load %arg5[%c0_5, %c0_6] : memref<4x4xf32, #tpu.memory_space<vmem>>, vector<4x4xf32>
    tpu.vector_store %arg5[%c0_5, %c0_6], %7 {strides = array<i32>} : memref<4x4xf32, #tpu.memory_space<vmem>>, vector<4x4xf32>,
    %c0_7 = arith.constant 0 : index
    %c0_8 = arith.constant 0 : index
    %9 = vector.load %arg6[%c0_7, %c0_8] : memref<4x1xf32, #tpu.memory_space<vmem>>, vector<4x1xf32>
    %10 = arith.extf %4 : vector<4x1024xbf16> to vector<4x1024xf32>
    %cst_9 = arith.constant dense<0.000000e+00> : vector<4xf32>
    %11 = vector.multi_reduction <add>, %10, %cst_9 [1] : vector<4x1024xf32> to vector<4xf32>
    %12 = vector.shape_cast %11 : vector<4xf32> to vector<4x1xf32>
    %13 = arith.addf %9, %12 : vector<4x1xf32>
    %c0_10 = arith.constant 0 : index
    %c0_11 = arith.constant 0 : index
    %14 = vector.load %arg6[%c0_10, %c0_11] : memref<4x1xf32, #tpu.memory_space<vmem>>, vector<4x1xf32>
    tpu.vector_store %arg6[%c0_10, %c0_11], %13 {strides = array<i32>} : memref<4x1xf32, #tpu.memory_space<vmem>>, vector<4x1xf32>,
    %c0_i32_12 = arith.constant 0 : i32
    %15 = arith.cmpi eq, %arg1, %c0_i32_12 : i32
    %16 = arith.extui %15 : i1 to i32
    %c0_i32_13 = arith.constant 0 : i32
    %17 = arith.cmpi ne, %16, %c0_i32_13 : i32
    scf.if %17 {
      %c0_14 = arith.constant 0 : index
      %c0_15 = arith.constant 0 : index
      %18 = vector.load %arg3[%c0_14, %c0_15] : memref<32x4xf32, #tpu.memory_space<vmem>>, vector<32x4xf32>
      %c0_16 = arith.constant 0 : index
      %c0_17 = arith.constant 0 : index
      %19 = vector.load %arg5[%c0_16, %c0_17] : memref<4x4xf32, #tpu.memory_space<vmem>>, vector<4x4xf32>
      %c0_18 = arith.constant 0 : index
      %c0_19 = arith.constant 0 : index
      %20 = vector.load %arg6[%c0_18, %c0_19] : memref<4x1xf32, #tpu.memory_space<vmem>>, vector<4x1xf32>
      %cst_20 = arith.constant dense<0.000000e+00> : vector<32x1xf32>
      %21 = tpu.matmul %18, %20, %cst_20 {dimension_numbers = #tpu.dot_dimension_numbers<[1], [0], [0], [1], [0, 0, 1, 1], [], []>} : vector<32x4xf32>, vector<4x1xf32>, vector<32x1xf32> -> vector<32x1xf32>
      %cst_21 = arith.constant dense<0.000000e+00> : vector<32x4xf32>
      %22 = tpu.matmul %18, %19, %cst_21 {dimension_numbers = #tpu.dot_dimension_numbers<[1], [0], [0], [1], [0, 0, 1, 1], [], []>} : vector<32x4xf32>, vector<4x4xf32>, vector<32x4xf32> -> vector<32x4xf32>
      %23 = arith.mulf %22, %18 : vector<32x4xf32>
      %cst_22 = arith.constant dense<0.000000e+00> : vector<32xf32>
      %24 = vector.multi_reduction <add>, %23, %cst_22 [1] : vector<32x4xf32> to vector<32xf32>
      %25 = vector.shape_cast %24 : vector<32xf32> to vector<32x1xf32>
      %26 = vector.extract_strided_slice %21 {offsets = [0, 0], sizes = [8, 1], strides = [1, 1]} : vector<32x1xf32> to vector<8x1xf32>
      %27 = vector.extract_strided_slice %21 {offsets = [8, 0], sizes = [8, 1], strides = [1, 1]} : vector<32x1xf32> to vector<8x1xf32>
      %28 = arith.addf %26, %27 : vector<8x1xf32>
      %29 = vector.extract_strided_slice %21 {offsets = [16, 0], sizes = [8, 1], strides = [1, 1]} : vector<32x1xf32> to vector<8x1xf32>
      %30 = arith.addf %28, %29 : vector<8x1xf32>
      %31 = vector.extract_strided_slice %21 {offsets = [24, 0], sizes = [8, 1], strides = [1, 1]} : vector<32x1xf32> to vector<8x1xf32>
      %32 = arith.addf %30, %31 : vector<8x1xf32>
      %33 = vector.extract_strided_slice %25 {offsets = [0, 0], sizes = [8, 1], strides = [1, 1]} : vector<32x1xf32> to vector<8x1xf32>
      %34 = vector.extract_strided_slice %25 {offsets = [8, 0], sizes = [8, 1], strides = [1, 1]} : vector<32x1xf32> to vector<8x1xf32>
      %35 = arith.addf %33, %34 : vector<8x1xf32>
      %36 = vector.extract_strided_slice %25 {offsets = [16, 0], sizes = [8, 1], strides = [1, 1]} : vector<32x1xf32> to vector<8x1xf32>
      %37 = arith.addf %35, %36 : vector<8x1xf32>
      %38 = vector.extract_strided_slice %25 {offsets = [24, 0], sizes = [8, 1], strides = [1, 1]} : vector<32x1xf32> to vector<8x1xf32>
      %39 = arith.addf %37, %38 : vector<8x1xf32>
      %cst_23 = arith.constant 4.096000e+03 : f32
      %40 = vector.broadcast %cst_23 : f32 to vector<8x1xf32>
      %41 = arith.divf %32, %40 : vector<8x1xf32>
      %cst_24 = arith.constant 4.096000e+03 : f32
      %42 = vector.broadcast %cst_24 : f32 to vector<8x1xf32>
      %43 = arith.divf %39, %42 : vector<8x1xf32>
      %44 = arith.mulf %41, %41 : vector<8x1xf32>
      %45 = arith.subf %43, %44 : vector<8x1xf32>
      %cst_25 = arith.constant 0.000000e+00 : f32
      %46 = vector.broadcast %cst_25 : f32 to vector<8x1xf32>
      %47 = arith.maximumf %45, %46 : vector<8x1xf32>
      %cst_26 = arith.constant 9.99999974E-6 : f32
      %48 = vector.broadcast %cst_26 : f32 to vector<8x1xf32>
      %49 = arith.addf %47, %48 : vector<8x1xf32>
      %50 = math.rsqrt %49 : vector<8x1xf32>
      %cst_27 = arith.constant 0.000000e+00 : f32
      %51 = vector.broadcast %cst_27 : f32 to vector<8x1xf32>
      %52 = arith.subf %51, %41 : vector<8x1xf32>
      %53 = arith.mulf %52, %50 : vector<8x1xf32>
      %54 = tpu.concatenate %50, %53 in 1 : vector<8x1xf32>, vector<8x1xf32> -> vector<8x2xf32>
      %c0_28 = arith.constant 0 : index
      %c0_29 = arith.constant 0 : index
      %c0_30 = arith.constant 0 : index
      %55 = vector.load %arg4[%c0_28, %c0_29, %c0_30] : memref<1x8x2xf32, #tpu.memory_space<vmem>>, vector<1x8x2xf32>
      %56 = vector.shape_cast %55 : vector<1x8x2xf32> to vector<8x2xf32>
      %57 = vector.shape_cast %54 : vector<8x2xf32> to vector<1x8x2xf32>
      tpu.vector_store %arg4[%c0_28, %c0_29, %c0_30], %57 {strides = array<i32>} : memref<1x8x2xf32, #tpu.memory_space<vmem>>, vector<1x8x2xf32>,
    } else {
    }
    return
  }
  func.func @transform_0(%arg0: i32, %arg1: i32) -> (i32, i32, i32) {
    %c0_i32 = arith.constant 0 : i32
    %c0_i32_0 = arith.constant 0 : i32
    return %arg0, %c0_i32, %arg1 : i32, i32, i32
  }
  func.func @transform_1(%arg0: i32, %arg1: i32) -> (i32, i32) {
    %c0_i32 = arith.constant 0 : i32
    %c0_i32_0 = arith.constant 0 : i32
    %c0_i32_1 = arith.constant 0 : i32
    return %c0_i32, %c0_i32_0 : i32, i32
  }
  func.func @transform_2(%arg0: i32, %arg1: i32) -> (i32, i32, i32) {
    %c0_i32 = arith.constant 0 : i32
    %c0_i32_0 = arith.constant 0 : i32
    %c0_i32_1 = arith.constant 0 : i32
    return %arg0, %c0_i32, %c0_i32_0 : i32, i32, i32
  }
}

module attributes {stable_mosaic.version = 11 : i64} {
  func.func @_stats_kernel(%arg0: i32, %arg1: i32, %arg2: memref<1x4x1024xbf16, #tpu.memory_space<vmem>>, %arg3: memref<32x4xf32, #tpu.memory_space<vmem>>, %arg4: memref<1x8x2xf32, #tpu.memory_space<vmem>>, %arg5: memref<4x4xf32, #tpu.memory_space<vmem>>, %arg6: memref<4x1xf32, #tpu.memory_space<vmem>>) attributes {dimension_semantics = [#tpu.dimension_semantics<parallel>, #tpu.dimension_semantics<arbitrary>], iteration_bounds = array<i64: 2, 1>, scalar_prefetch = 0 : i64, scratch_operands = 2 : i64, tpu.core_type = #tpu.core_type<tc>, window_params = [{transform_indices = @transform_0, window_bounds = array<i64: 1, 4, 1024>}, {pipeline_mode = #tpu.pipeline_mode<synchronous>, transform_indices = @transform_1, window_bounds = array<i64: 32, 4>}, {transform_indices = @transform_2, window_bounds = array<i64: 1, 8, 2>}]} {
    %c0_i32 = arith.constant 0 : i32
    %0 = arith.cmpi eq, %arg1, %c0_i32 : i32
    %1 = arith.extui %0 : i1 to i32
    %c0_i32_0 = arith.constant 0 : i32
    %2 = arith.cmpi ne, %1, %c0_i32_0 : i32
    scf.if %2 {
      %cst_14 = arith.constant 0.000000e+00 : f32
      %18 = vector.broadcast %cst_14 : f32 to vector<4x4xf32>
      %c0_15 = arith.constant 0 : index
      %c0_16 = arith.constant 0 : index
      %19 = vector.load %arg5[%c0_15, %c0_16] : memref<4x4xf32, #tpu.memory_space<vmem>>, vector<4x4xf32>
      tpu.vector_store %arg5[%c0_15, %c0_16], %18 {strides = array<i32>} : memref<4x4xf32, #tpu.memory_space<vmem>>, vector<4x4xf32>,
      %cst_17 = arith.constant 0.000000e+00 : f32
      %20 = vector.broadcast %cst_17 : f32 to vector<4x1xf32>
      %c0_18 = arith.constant 0 : index
      %c0_19 = arith.constant 0 : index
      %21 = vector.load %arg6[%c0_18, %c0_19] : memref<4x1xf32, #tpu.memory_space<vmem>>, vector<4x1xf32>
      tpu.vector_store %arg6[%c0_18, %c0_19], %20 {strides = array<i32>} : memref<4x1xf32, #tpu.memory_space<vmem>>, vector<4x1xf32>,
    } else {
    }
    %c0 = arith.constant 0 : index
    %c0_1 = arith.constant 0 : index
    %c0_2 = arith.constant 0 : index
    %3 = vector.load %arg2[%c0, %c0_1, %c0_2] : memref<1x4x1024xbf16, #tpu.memory_space<vmem>>, vector<1x4x1024xbf16>
    %4 = vector.shape_cast %3 : vector<1x4x1024xbf16> to vector<4x1024xbf16>
    %c0_3 = arith.constant 0 : index
    %c0_4 = arith.constant 0 : index
    %5 = vector.load %arg5[%c0_3, %c0_4] : memref<4x4xf32, #tpu.memory_space<vmem>>, vector<4x4xf32>
    %cst = arith.constant dense<0.000000e+00> : vector<4x4xf32>
    %6 = tpu.matmul %4, %4, %cst {dimension_numbers = #tpu.dot_dimension_numbers<[1], [1], [0], [0], [0, 0, 1, 0], [], []>} : vector<4x1024xbf16>, vector<4x1024xbf16>, vector<4x4xf32> -> vector<4x4xf32>
    %7 = arith.addf %5, %6 : vector<4x4xf32>
    %c0_5 = arith.constant 0 : index
    %c0_6 = arith.constant 0 : index
    %8 = vector.load %arg5[%c0_5, %c0_6] : memref<4x4xf32, #tpu.memory_space<vmem>>, vector<4x4xf32>
    tpu.vector_store %arg5[%c0_5, %c0_6], %7 {strides = array<i32>} : memref<4x4xf32, #tpu.memory_space<vmem>>, vector<4x4xf32>,
    %c0_7 = arith.constant 0 : index
    %c0_8 = arith.constant 0 : index
    %9 = vector.load %arg6[%c0_7, %c0_8] : memref<4x1xf32, #tpu.memory_space<vmem>>, vector<4x1xf32>
    %10 = arith.extf %4 : vector<4x1024xbf16> to vector<4x1024xf32>
    %cst_9 = arith.constant dense<0.000000e+00> : vector<4xf32>
    %11 = vector.multi_reduction <add>, %10, %cst_9 [1] : vector<4x1024xf32> to vector<4xf32>
    %12 = vector.shape_cast %11 : vector<4xf32> to vector<4x1xf32>
    %13 = arith.addf %9, %12 : vector<4x1xf32>
    %c0_10 = arith.constant 0 : index
    %c0_11 = arith.constant 0 : index
    %14 = vector.load %arg6[%c0_10, %c0_11] : memref<4x1xf32, #tpu.memory_space<vmem>>, vector<4x1xf32>
    tpu.vector_store %arg6[%c0_10, %c0_11], %13 {strides = array<i32>} : memref<4x1xf32, #tpu.memory_space<vmem>>, vector<4x1xf32>,
    %c0_i32_12 = arith.constant 0 : i32
    %15 = arith.cmpi eq, %arg1, %c0_i32_12 : i32
    %16 = arith.extui %15 : i1 to i32
    %c0_i32_13 = arith.constant 0 : i32
    %17 = arith.cmpi ne, %16, %c0_i32_13 : i32
    scf.if %17 {
      %c0_14 = arith.constant 0 : index
      %c0_15 = arith.constant 0 : index
      %18 = vector.load %arg3[%c0_14, %c0_15] : memref<32x4xf32, #tpu.memory_space<vmem>>, vector<32x4xf32>
      %c0_16 = arith.constant 0 : index
      %c0_17 = arith.constant 0 : index
      %19 = vector.load %arg5[%c0_16, %c0_17] : memref<4x4xf32, #tpu.memory_space<vmem>>, vector<4x4xf32>
      %c0_18 = arith.constant 0 : index
      %c0_19 = arith.constant 0 : index
      %20 = vector.load %arg6[%c0_18, %c0_19] : memref<4x1xf32, #tpu.memory_space<vmem>>, vector<4x1xf32>
      %cst_20 = arith.constant dense<0.000000e+00> : vector<32x1xf32>
      %21 = tpu.matmul %18, %20, %cst_20 {dimension_numbers = #tpu.dot_dimension_numbers<[1], [0], [0], [1], [0, 0, 1, 1], [], []>} : vector<32x4xf32>, vector<4x1xf32>, vector<32x1xf32> -> vector<32x1xf32>
      %cst_21 = arith.constant dense<0.000000e+00> : vector<32x4xf32>
      %22 = tpu.matmul %18, %19, %cst_21 {dimension_numbers = #tpu.dot_dimension_numbers<[1], [0], [0], [1], [0, 0, 1, 1], [], []>} : vector<32x4xf32>, vector<4x4xf32>, vector<32x4xf32> -> vector<32x4xf32>
      %23 = arith.mulf %22, %18 : vector<32x4xf32>
      %cst_22 = arith.constant dense<0.000000e+00> : vector<32xf32>
      %24 = vector.multi_reduction <add>, %23, %cst_22 [1] : vector<32x4xf32> to vector<32xf32>
      %25 = vector.shape_cast %24 : vector<32xf32> to vector<32x1xf32>
      %26 = vector.extract_strided_slice %21 {offsets = [0, 0], sizes = [8, 1], strides = [1, 1]} : vector<32x1xf32> to vector<8x1xf32>
      %27 = vector.extract_strided_slice %21 {offsets = [8, 0], sizes = [8, 1], strides = [1, 1]} : vector<32x1xf32> to vector<8x1xf32>
      %28 = arith.addf %26, %27 : vector<8x1xf32>
      %29 = vector.extract_strided_slice %21 {offsets = [16, 0], sizes = [8, 1], strides = [1, 1]} : vector<32x1xf32> to vector<8x1xf32>
      %30 = arith.addf %28, %29 : vector<8x1xf32>
      %31 = vector.extract_strided_slice %21 {offsets = [24, 0], sizes = [8, 1], strides = [1, 1]} : vector<32x1xf32> to vector<8x1xf32>
      %32 = arith.addf %30, %31 : vector<8x1xf32>
      %33 = vector.extract_strided_slice %25 {offsets = [0, 0], sizes = [8, 1], strides = [1, 1]} : vector<32x1xf32> to vector<8x1xf32>
      %34 = vector.extract_strided_slice %25 {offsets = [8, 0], sizes = [8, 1], strides = [1, 1]} : vector<32x1xf32> to vector<8x1xf32>
      %35 = arith.addf %33, %34 : vector<8x1xf32>
      %36 = vector.extract_strided_slice %25 {offsets = [16, 0], sizes = [8, 1], strides = [1, 1]} : vector<32x1xf32> to vector<8x1xf32>
      %37 = arith.addf %35, %36 : vector<8x1xf32>
      %38 = vector.extract_strided_slice %25 {offsets = [24, 0], sizes = [8, 1], strides = [1, 1]} : vector<32x1xf32> to vector<8x1xf32>
      %39 = arith.addf %37, %38 : vector<8x1xf32>
      %cst_23 = arith.constant 4.096000e+03 : f32
      %40 = vector.broadcast %cst_23 : f32 to vector<8x1xf32>
      %41 = arith.divf %32, %40 : vector<8x1xf32>
      %cst_24 = arith.constant 4.096000e+03 : f32
      %42 = vector.broadcast %cst_24 : f32 to vector<8x1xf32>
      %43 = arith.divf %39, %42 : vector<8x1xf32>
      %44 = arith.mulf %41, %41 : vector<8x1xf32>
      %45 = arith.subf %43, %44 : vector<8x1xf32>
      %cst_25 = arith.constant 0.000000e+00 : f32
      %46 = vector.broadcast %cst_25 : f32 to vector<8x1xf32>
      %47 = arith.maximumf %45, %46 : vector<8x1xf32>
      %cst_26 = arith.constant 9.99999974E-6 : f32
      %48 = vector.broadcast %cst_26 : f32 to vector<8x1xf32>
      %49 = arith.addf %47, %48 : vector<8x1xf32>
      %50 = math.rsqrt %49 : vector<8x1xf32>
      %cst_27 = arith.constant 0.000000e+00 : f32
      %51 = vector.broadcast %cst_27 : f32 to vector<8x1xf32>
      %52 = arith.subf %51, %41 : vector<8x1xf32>
      %53 = arith.mulf %52, %50 : vector<8x1xf32>
      %54 = tpu.concatenate %50, %53 in 1 : vector<8x1xf32>, vector<8x1xf32> -> vector<8x2xf32>
      %c0_28 = arith.constant 0 : index
      %c0_29 = arith.constant 0 : index
      %c0_30 = arith.constant 0 : index
      %55 = vector.load %arg4[%c0_28, %c0_29, %c0_30] : memref<1x8x2xf32, #tpu.memory_space<vmem>>, vector<1x8x2xf32>
      %56 = vector.shape_cast %55 : vector<1x8x2xf32> to vector<8x2xf32>
      %57 = vector.shape_cast %54 : vector<8x2xf32> to vector<1x8x2xf32>
      tpu.vector_store %arg4[%c0_28, %c0_29, %c0_30], %57 {strides = array<i32>} : memref<1x8x2xf32, #tpu.memory_space<vmem>>, vector<1x8x2xf32>,
    } else {
    }
    return
  }
  func.func @transform_0(%arg0: i32, %arg1: i32) -> (i32, i32, i32) {
    %c0_i32 = arith.constant 0 : i32
    %c0_i32_0 = arith.constant 0 : i32
    return %arg0, %c0_i32, %arg1 : i32, i32, i32
  }
  func.func @transform_1(%arg0: i32, %arg1: i32) -> (i32, i32) {
    %c0_i32 = arith.constant 0 : i32
    %c0_i32_0 = arith.constant 0 : i32
    %c0_i32_1 = arith.constant 0 : i32
    return %c0_i32, %c0_i32_0 : i32, i32
  }
  func.func @transform_2(%arg0: i32, %arg1: i32) -> (i32, i32, i32) {
    %c0_i32 = arith.constant 0 : i32
    %c0_i32_0 = arith.constant 0 : i32
    %c0_i32_1 = arith.constant 0 : i32
    return %arg0, %c0_i32, %c0_i32_0 : i32, i32, i32
  }
}

</mosaic_0001>

<llo_original>
// kernel: tpu_custom_call.1
$region0: #{tpu_custom_call.1}
  #allocation0 [shape = 'u32[]', space=smem, size = 0x4, offset = 0x4, fixed_abs, tag = 'smem constant byte address 0x4 - core index']
  #allocation1 [shape = 'u32[72,128]{1,0:T(1,128)}', space=vmem, size = 0x9000, scoped, tag = 'internal scratch']
  #allocation2 [shape = 'f32[4,4]{1,0:T(4,128)}', space=vmem, size = 0x800, scoped, tag = 'scratch operand']
  #allocation3 [shape = 'f32[4,1]{1,0:T(4,128)}', space=vmem, size = 0x800, scoped, tag = 'scratch operand']
  %s0 = inlined_call_operand.vmem [shape: bf16[2,4,1024], index: 0, kind: input, shape index: {}]
  %s1 = inlined_call_operand.vmem [shape: f32[32,4], index: 1, kind: input, shape index: {}]
  %s2 = inlined_call_operand.vmem [shape: f32[2,8,2], index: 2, kind: output, shape index: {}]
  %s3 = sld [smem:[#allocation0]]
  $region49: #{tpu_custom_call.1} parent=0
    _
  %s5 = ssub.s32 1, %s3
  %s6 = scalar_select 0, %s5, %s3
  loop: start=0, step=1, limit=4
  $region2: #{tpu_custom_call.1} parent=0 // loop_pre_header
    _
  $region3: #{tpu_custom_call.1} parent=0 // loop_header
    %s8 = sphi 0, %s12
    %p9 = scmp.ge.s32.totalorder %s8, 4
    %s15 = sphi 0, %s27
    %s16 = sphi 0, %s23
    %s17 = sphi 0, %s15
    %s18 = sphi 0, %s16
    %s19 = sphi 0, %s17
    %s20 = sphi 0, %s18
    %s32 = sphi 0, %s34
    %s35 = sphi 0, %s32
    %s36 = sphi 0, %s35
    %s52 = sphi 0, %s36
    %s56 = sphi 0, %s56
    %s58 = sphi 0, %s56
    %s59 = sphi 0, %s58
    %s73 = sphi 0, %s59
    %s79 = sphi 0, %s81
    %s82 = sphi 0, %s79
    %s83 = sphi 0, %s82
    %s99 = sphi 0, %s83
  $region4: #{tpu_custom_call.1} parent=0 // loop_header_branch
    %11 = sbr.rel (%p9) target = $region8
  $region5: #{tpu_custom_call.1} parent=0 // loop_body
    %s13 = ssub.s32 %s8, 1
    %s14 = ssub.s32 %s8, 2
    %s21 = sadd.s32 1, %s16
    %p22 = scmp.ge.s32.totalorder %s21, 1
    %s23 = scalar_select %p22, 0, %s21
    %s24 = sadd.s32 1, %s15
    %s25 = scalar_select %p22, %s24, %s15
    %p26 = scmp.ge.s32.totalorder %s25, 2
    %s27 = scalar_select %p26, 0, %s25
    %s28 = ssub.s32 %s15, %s27
    %s29 = ssub.s32 %s16, %s23
    %s30 = sor.u32 %s28, %s29
    %p31 = scmp.eq.s32.totalorder %s30, 0
    %s33 = sadd.s32 %s32, 1
    %s34 = scalar_select %p31, %s32, %s33
    %p37 = pneg %p31
    %p38 = scmp.eq.s32.totalorder %s8, 1
    %p39 = por %p37, %p38
    %p40 = scmp.ne.s32.totalorder %s32, %s35
    %p41 = scmp.eq.s32.totalorder %s8, 0
    %p42 = por %p40, %p41
    %p43 = scmp.ne.s32.totalorder %s32, %s35
    %p44 = scmp.eq.s32.totalorder %s13, 1
    %p45 = por %p43, %p44
    %p46 = scmp.ne.s32.totalorder %s35, %s36
    %p47 = scmp.eq.s32.totalorder %s13, 0
    %p48 = por %p46, %p47
    %p49 = scmp.ne.s32.totalorder %s35, %s36
    %p50 = scmp.eq.s32.totalorder %s14, 1
    %p51 = por %p49, %p50
    %p53 = scmp.ne.s32.totalorder %s36, %s52
    %p54 = scmp.eq.s32.totalorder %s14, 0
    %p55 = por %p53, %p54
    %s57 = sadd.s32 %s56, 1
    %p60 = scmp.eq.s32.totalorder %s8, 1
    %p61 = scmp.ne.s32.totalorder %s56, %s58
    %p62 = scmp.eq.s32.totalorder %s8, 0
    %p63 = por %p61, %p62
    %p64 = scmp.ne.s32.totalorder %s56, %s58
    %p65 = scmp.eq.s32.totalorder %s13, 1
    %p66 = por %p64, %p65
    %p67 = scmp.ne.s32.totalorder %s58, %s59
    %p68 = scmp.eq.s32.totalorder %s13, 0
    %p69 = por %p67, %p68
    %p70 = scmp.ne.s32.totalorder %s58, %s59
    %p71 = scmp.eq.s32.totalorder %s14, 1
    %p72 = por %p70, %p71
    %p74 = scmp.ne.s32.totalorder %s59, %s73
    %p75 = scmp.eq.s32.totalorder %s14, 0
    %p76 = por %p74, %p75
    %s77 = ssub.s32 %s15, %s27
    %p78 = scmp.eq.s32.totalorder %s77, 0
    %s80 = sadd.s32 %s79, 1
    %s81 = scalar_select %p78, %s79, %s80
    %p84 = pneg %p78
    %p85 = scmp.eq.s32.totalorder %s8, 1
    %p86 = por %p84, %p85
    %p87 = scmp.ne.s32.totalorder %s79, %s82
    %p88 = scmp.eq.s32.totalorder %s8, 0
    %p89 = por %p87, %p88
    %p90 = scmp.ne.s32.totalorder %s79, %s82
    %p91 = scmp.eq.s32.totalorder %s13, 1
    %p92 = por %p90, %p91
    %p93 = scmp.ne.s32.totalorder %s82, %s83
    %p94 = scmp.eq.s32.totalorder %s13, 0
    %p95 = por %p93, %p94
    %p96 = scmp.ne.s32.totalorder %s82, %s83
    %p97 = scmp.eq.s32.totalorder %s14, 1
    %p98 = por %p96, %p97
    %p100 = scmp.ne.s32.totalorder %s83, %s99
    %p101 = scmp.eq.s32.totalorder %s14, 0
    %p102 = por %p100, %p101
    %p103 = scmp.le.s32.totalorder 1, %s8
    %p104 = scmp.lt.s32.totalorder %s8, 3
    %p105 = pnand %p103, %p104
    %p106 = pneg %p105
    // Predicated region
    $region9: #{tpu_custom_call.1} parent=5 // pred_check
      _
    $region10: #{tpu_custom_call.1} parent=5 // pred_check_branch
      %108 = sbr.rel (%p105) target = $region12
    $region11: #{tpu_custom_call.1} parent=5 // pred_region
      %s109 = ssub.s32 %s8, 1
      // Predicated region
      $region13: #{tpu_custom_call.1} parent=11 // pred_check
        %p110 = pneg %p69
      $region14: #{tpu_custom_call.1} parent=11 // pred_check_branch
        %112 = sbr.rel (%p110) target = $region16
      $region15: #{tpu_custom_call.1} parent=11 // pred_region
        _
      $region16: #{tpu_custom_call.1} parent=11 // pred_fallthru
        _
    $region12: #{tpu_custom_call.1} parent=5 // pred_fallthru
      _
    %p113 = scmp.lt.s32.totalorder %s8, 2
    // Predicated region
    $region17: #{tpu_custom_call.1} parent=5 // pred_check
      %p114 = pneg %p113
    $region18: #{tpu_custom_call.1} parent=5 // pred_check_branch
      %116 = sbr.rel (%p114) target = $region20
    $region19: #{tpu_custom_call.1} parent=5 // pred_region
      // Predicated region
      $region21: #{tpu_custom_call.1} parent=19 // pred_check
        %p117 = pneg %p42
      $region22: #{tpu_custom_call.1} parent=19 // pred_check_branch
        %119 = sbr.rel (%p117) target = $region24
      $region23: #{tpu_custom_call.1} parent=19 // pred_region
        %s120 = smul.u32 8, %s16
        %p121 = scmp.lt.s32.totalorder %s15, 1
        %s122 = scalar_select %p121, %s15, 1
        %p123 = scmp.lt.s32.totalorder %s120, 7
        %s124 = scalar_select %p123, %s120, 7
        %s125 = smul.addr %s122, 8
        %s126 = sadd.s32 %s124, %s125
        %s127 = smul.addr %s126, 2
        %s128 = scalar_lea.vmem %s0, %s127
        %s129 = smul.u32 8, %s16
      $region24: #{tpu_custom_call.1} parent=19 // pred_fallthru
        _
    $region20: #{tpu_custom_call.1} parent=5 // pred_fallthru
      _
    %p130 = scmp.le.s32.totalorder 1, %s8
    %p131 = scmp.lt.s32.totalorder %s8, 3
    %p132 = pnand %p130, %p131
    %p133 = pneg %p132
    // Predicated region
    $region25: #{tpu_custom_call.1} parent=5 // pred_check
      _
    $region26: #{tpu_custom_call.1} parent=5 // pred_check_branch
      %135 = sbr.rel (%p132) target = $region28
    $region27: #{tpu_custom_call.1} parent=5 // pred_region
      %s136 = ssub.s32 %s8, 1
      %s137 = smul.u32 8, %s18
      %p138 = scmp.lt.s32.totalorder %s17, 1
      %s139 = scalar_select %p138, %s17, 1
      %p140 = scmp.lt.s32.totalorder %s137, 7
      %s141 = scalar_select %p140, %s137, 7
      %s142 = smul.addr %s139, 8
      %s143 = sadd.s32 %s141, %s142
      %s144 = smul.addr %s143, 2
      %s145 = scalar_lea.vmem %s0, %s144
      %p146 = pneg %p48
      %p147 = pneg %p45
      %p148 = pneg %p69
      %p149 = pneg %p66
      %p150 = pneg %p95
      %p151 = pneg %p92
      %p152 = scmp.lt.s32.totalorder %s17, 1
      %s153 = scalar_select %p152, %s17, 1
      %s154 = smul.addr %s153, 8
      %s155 = scalar_lea.vmem %s2, %s154
      %s156 = smul.u32 8, %s18
      %p157 = scmp.lt.s32.totalorder %s17, 1
      %s158 = scalar_select %p157, %s17, 1
      %p159 = scmp.lt.s32.totalorder %s156, 7
      %s160 = scalar_select %p159, %s156, 7
      %s161 = smul.addr %s158, 8
      %s162 = sadd.s32 %s160, %s161
      %s163 = smul.addr %s162, 2
      %s164 = scalar_lea.vmem %s0, %s163
      %s165 = smul.u32 8, %s18
      %p166 = scmp.lt.s32.totalorder %s17, 1
      %s167 = scalar_select %p166, %s17, 1
      %s168 = smul.addr %s167, 8
      %s169 = scalar_lea.vmem %s2, %s168
      %p171 = scmp.eq.s32.totalorder %s18, 0
      // Predicated region
      $region29: #{tpu_custom_call.1} parent=27 // pred_check
        %p172 = pneg %p171
      $region30: #{tpu_custom_call.1} parent=27 // pred_check_branch
        %174 = sbr.rel (%p172) target = $region32
      $region31: #{tpu_custom_call.1} parent=27 // pred_region
        %vm175 = vcmask 27648
        %176 = vst.msk [vmem:[#allocation2] sm:$0xf] %vm175, 0.0
        %vm177 = vcmask 3072
        %178 = vst.msk [vmem:[#allocation3] sm:$0xf] %vm177, 0.0
      $region32: #{tpu_custom_call.1} parent=27 // pred_fallthru
        _
      %v179 = vld [vmem:[%s164] sm:$0xff]
      %v180 = vld [vmem:[%s164 + $0x8] sm:$0xff]
      %v181 = vld [vmem:[#allocation2] sm:$0xf]
      %183 = vst [vmem:[#allocation1] ss:$4 sm:$0xff] %v179
      %s185 = scalar_lea.vmem [#allocation1], 32
      %186 = vst [vmem:[%s185] ss:$4 sm:$0xff] %v180
      %v187 = vld.sshfl [vmem:[#allocation1] sm:$0xff pattern:$0x73625140]
      %v188 = vld.sshfl [vmem:[#allocation1 + $0x8] sm:$0xff pattern:$0x73625140]
      %v189 = vld.sshfl [vmem:[#allocation1 + $0x10] sm:$0xff pattern:$0x73625140]
      %v190 = vld.sshfl [vmem:[#allocation1 + $0x18] sm:$0xff pattern:$0x73625140]
      %v191 = vld.sshfl [vmem:[#allocation1 + $0x20] sm:$0xff pattern:$0x73625140]
      %v192 = vld.sshfl [vmem:[#allocation1 + $0x28] sm:$0xff pattern:$0x73625140]
      %v193 = vld.sshfl [vmem:[#allocation1 + $0x30] sm:$0xff pattern:$0x73625140]
      %v194 = vld.sshfl [vmem:[#allocation1 + $0x38] sm:$0xff pattern:$0x73625140]
      %203 = vst [vmem:[#allocation1] ss:$4 sm:$0xff] %v179
      %s204 = scalar_lea.vmem [#allocation1], 32
      %205 = vst [vmem:[%s204] ss:$4 sm:$0xff] %v180
      %v206 = vld.sshfl [vmem:[#allocation1] sm:$0xff pattern:$0x73625140]
      %v207 = vld.sshfl [vmem:[#allocation1 + $0x8] sm:$0xff pattern:$0x73625140]
      %v208 = vld.sshfl [vmem:[#allocation1 + $0x10] sm:$0xff pattern:$0x73625140]
      %v209 = vld.sshfl [vmem:[#allocation1 + $0x18] sm:$0xff pattern:$0x73625140]
      %v210 = vld.sshfl [vmem:[#allocation1 + $0x20] sm:$0xff pattern:$0x73625140]
      %v211 = vld.sshfl [vmem:[#allocation1 + $0x28] sm:$0xff pattern:$0x73625140]
      %v212 = vld.sshfl [vmem:[#allocation1 + $0x30] sm:$0xff pattern:$0x73625140]
      %v213 = vld.sshfl [vmem:[#allocation1 + $0x38] sm:$0xff pattern:$0x73625140]
      %222 = vmatpush.bf16.xpose.msra.mxu0 0
      %223 = vmatpush.bf16.xpose.msra.mxu0 0
      %224 = vmatpush.bf16.xpose.msra.mxu0 0
      %225 = vmatpush.bf16.xpose.msra.mxu0 0
      %226 = vmatpush.bf16.xpose.msra.mxu0 0
      %227 = vmatpush.bf16.xpose.msra.mxu0 0
      %228 = vmatpush.bf16.xpose.msra.mxu0 0
      %229 = vmatpush.bf16.xpose.msra.mxu0 %v206
      %230 = vmatmul.bf16.gmra.mxu0 %v187
      %v231 = vpop.f32.mrf.mxu0
      %v232 = vadd.f32 0.0, %v231
      %v233 = vpop.f32.mrf.mxu0
      %234 = vdwg.mxu0
      %235 = vmatpush.bf16.xpose.msra.mxu0 0
      %236 = vmatpush.bf16.xpose.msra.mxu0 0
      %237 = vmatpush.bf16.xpose.msra.mxu0 0
      %238 = vmatpush.bf16.xpose.msra.mxu0 0
      %239 = vmatpush.bf16.xpose.msra.mxu0 0
      %240 = vmatpush.bf16.xpose.msra.mxu0 0
      %241 = vmatpush.bf16.xpose.msra.mxu0 0
      %242 = vmatpush.bf16.xpose.msra.mxu0 %v207
      %243 = vmatmul.bf16.gmra.mxu0 %v188
      %v244 = vpop.f32.mrf.mxu0
      %v245 = vadd.f32 %v232, %v244
      %v246 = vpop.f32.mrf.mxu0
      %247 = vdwg.mxu0
      %248 = vmatpush.bf16.xpose.msra.mxu0 0
      %249 = vmatpush.bf16.xpose.msra.mxu0 0
      %250 = vmatpush.bf16.xpose.msra.mxu0 0
      %251 = vmatpush.bf16.xpose.msra.mxu0 0
      %252 = vmatpush.bf16.xpose.msra.mxu0 0
      %253 = vmatpush.bf16.xpose.msra.mxu0 0
      %254 = vmatpush.bf16.xpose.msra.mxu0 0
      %255 = vmatpush.bf16.xpose.msra.mxu0 %v208
      %256 = vmatmul.bf16.gmra.mxu0 %v189
      %v257 = vpop.f32.mrf.mxu0
      %v258 = vadd.f32 %v245, %v257
      %v259 = vpop.f32.mrf.mxu0
      %260 = vdwg.mxu0
      %261 = vmatpush.bf16.xpose.msra.mxu0 0
      %262 = vmatpush.bf16.xpose.msra.mxu0 0
      %263 = vmatpush.bf16.xpose.msra.mxu0 0
      %264 = vmatpush.bf16.xpose.msra.mxu0 0
      %265 = vmatpush.bf16.xpose.msra.mxu0 0
      %266 = vmatpush.bf16.xpose.msra.mxu0 0
      %267 = vmatpush.bf16.xpose.msra.mxu0 0
      %268 = vmatpush.bf16.xpose.msra.mxu0 %v209
      %269 = vmatmul.bf16.gmra.mxu0 %v190
      %v270 = vpop.f32.mrf.mxu0
      %v271 = vadd.f32 %v258, %v270
      %v272 = vpop.f32.mrf.mxu0
      %273 = vdwg.mxu0
      %274 = vmatpush.bf16.xpose.msra.mxu0 0
      %275 = vmatpush.bf16.xpose.msra.mxu0 0
      %276 = vmatpush.bf16.xpose.msra.mxu0 0
      %277 = vmatpush.bf16.xpose.msra.mxu0 0
      %278 = vmatpush.bf16.xpose.msra.mxu0 0
      %279 = vmatpush.bf16.xpose.msra.mxu0 0
      %280 = vmatpush.bf16.xpose.msra.mxu0 0
      %281 = vmatpush.bf16.xpose.msra.mxu0 %v210
      %282 = vmatmul.bf16.gmra.mxu0 %v191
      %v283 = vpop.f32.mrf.mxu0
      %v284 = vadd.f32 %v271, %v283
      %v285 = vpop.f32.mrf.mxu0
      %286 = vdwg.mxu0
      %287 = vmatpush.bf16.xpose.msra.mxu0 0
      %288 = vmatpush.bf16.xpose.msra.mxu0 0
      %289 = vmatpush.bf16.xpose.msra.mxu0 0
      %290 = vmatpush.bf16.xpose.msra.mxu0 0
      %291 = vmatpush.bf16.xpose.msra.mxu0 0
      %292 = vmatpush.bf16.xpose.msra.mxu0 0
      %293 = vmatpush.bf16.xpose.msra.mxu0 0
      %294 = vmatpush.bf16.xpose.msra.mxu0 %v211
      %295 = vmatmul.bf16.gmra.mxu0 %v192
      %v296 = vpop.f32.mrf.mxu0
      %v297 = vadd.f32 %v284, %v296
      %v298 = vpop.f32.mrf.mxu0
      %299 = vdwg.mxu0
      %300 = vmatpush.bf16.xpose.msra.mxu0 0
      %301 = vmatpush.bf16.xpose.msra.mxu0 0
      %302 = vmatpush.bf16.xpose.msra.mxu0 0
      %303 = vmatpush.bf16.xpose.msra.mxu0 0
      %304 = vmatpush.bf16.xpose.msra.mxu0 0
      %305 = vmatpush.bf16.xpose.msra.mxu0 0
      %306 = vmatpush.bf16.xpose.msra.mxu0 0
      %307 = vmatpush.bf16.xpose.msra.mxu0 %v212
      %308 = vmatmul.bf16.gmra.mxu0 %v193
      %v309 = vpop.f32.mrf.mxu0
      %v310 = vadd.f32 %v297, %v309
      %v311 = vpop.f32.mrf.mxu0
      %312 = vdwg.mxu0
      %313 = vmatpush.bf16.xpose.msra.mxu0 0
      %314 = vmatpush.bf16.xpose.msra.mxu0 0
      %315 = vmatpush.bf16.xpose.msra.mxu0 0
      %316 = vmatpush.bf16.xpose.msra.mxu0 0
      %317 = vmatpush.bf16.xpose.msra.mxu0 0
      %318 = vmatpush.bf16.xpose.msra.mxu0 0
      %319 = vmatpush.bf16.xpose.msra.mxu0 0
      %320 = vmatpush.bf16.xpose.msra.mxu0 %v213
      %321 = vmatmul.bf16.gmra.mxu0 %v194
      %v322 = vpop.f32.mrf.mxu0
      %v323 = vadd.f32 %v310, %v322
      %v324 = vpop.f32.mrf.mxu0
      %325 = vdwg.mxu0
      %v326 = vadd.f32 %v181, %v323
      %vm327 = vcmask 27648
      %328 = vst.msk [vmem:[#allocation2] sm:$0xf] %vm327, %v326
      %v329 = vld [vmem:[#allocation3] sm:$0xf]
      %v330 = vunpack.c.l.bf16 %v179
      %v331 = vunpack.c.h.bf16 %v179
      %v332 = vunpack.c.l.bf16 %v180
      %v333 = vunpack.c.h.bf16 %v180
      %338 = vst [vmem:[#allocation1] ss:$2 sm:$0xff] %v330
      %s339 = scalar_lea.vmem [#allocation1], 16
      %340 = vst [vmem:[%s339] ss:$2 sm:$0xff] %v331
      %s341 = scalar_lea.vmem [#allocation1], 32
      %342 = vst [vmem:[%s341] ss:$2 sm:$0xff] %v332
      %s343 = scalar_lea.vmem [#allocation1], 48
      %344 = vst [vmem:[%s343] ss:$2 sm:$0xff] %v333
      %v345 = vld.sshfl [vmem:[#allocation1] sm:$0xff pattern:$0x75316420]
      %v346 = vld.sshfl [vmem:[#allocation1 + $0x8] sm:$0xff pattern:$0x75316420]
      %v347 = vld.sshfl [vmem:[#allocation1 + $0x10] sm:$0xff pattern:$0x75316420]
      %v348 = vld.sshfl [vmem:[#allocation1 + $0x18] sm:$0xff pattern:$0x75316420]
      %v349 = vld.sshfl [vmem:[#allocation1 + $0x20] sm:$0xff pattern:$0x75316420]
      %v350 = vld.sshfl [vmem:[#allocation1 + $0x28] sm:$0xff pattern:$0x75316420]
      %v351 = vld.sshfl [vmem:[#allocation1 + $0x30] sm:$0xff pattern:$0x75316420]
      %v352 = vld.sshfl [vmem:[#allocation1 + $0x38] sm:$0xff pattern:$0x75316420]
      %vm361 = vcmask 1043456
      %v362 = vsel %vm361, %v345, 0.0
      %v363 = vsel %vm361, %v346, 0.0
      %v364 = vadd.f32 %v362, %v363
      %v365 = vsel %vm361, %v347, 0.0
      %v366 = vadd.f32 %v364, %v365
      %v367 = vsel %vm361, %v348, 0.0
      %v368 = vadd.f32 %v366, %v367
      %v369 = vsel %vm361, %v349, 0.0
      %v370 = vadd.f32 %v368, %v369
      %v371 = vsel %vm361, %v350, 0.0
      %v372 = vadd.f32 %v370, %v371
      %v373 = vsel %vm361, %v351, 0.0
      %v374 = vadd.f32 %v372, %v373
      %v375 = vsel %vm361, %v352, 0.0
      %v376 = vadd.f32 %v374, %v375
      %377 = vadd.xlane.f32.xlu0 %v376
      %v378 = vpop.xlane.xlu0 %377
      %v379 = vadd.f32 %v329, %v378
      %vm380 = vcmask 3072
      %381 = vst.msk [vmem:[#allocation3] sm:$0xf] %vm380, %v379
      // Predicated region
      $region33: #{tpu_custom_call.1} parent=27 // pred_check
        %p382 = pneg %p171
      $region34: #{tpu_custom_call.1} parent=27 // pred_check_branch
        %384 = sbr.rel (%p382) target = $region36
      $region35: #{tpu_custom_call.1} parent=27 // pred_region
        %v385 = vld [vmem:[%s1] sm:$0xff]
        %v386 = vld [vmem:[%s1 + $0x8] sm:$0xff]
        %v387 = vld [vmem:[%s1 + $0x10] sm:$0xff]
        %v388 = vld [vmem:[%s1 + $0x18] sm:$0xff]
        %v389 = vld [vmem:[#allocation2] sm:$0xf]
        %v390 = vld [vmem:[#allocation3] sm:$0xf]
        %vm391 = vcmask 31744
        %v393 = vsel %vm391, %v385, 0
        %v396 = vsel %vm391, %v386, 0
        %v399 = vsel %vm391, %v387, 0
        %v402 = vsel %vm391, %v388, 0
        %v405 = vsel %vm361, %v390, 0
        %407 = vmatpush.msra.mxu0 0.0
        %408 = vmatpush.msra.mxu0 0.0
        %409 = vmatpush.msra.mxu0 0.0
        %410 = vmatpush.msra.mxu0 0.0
        %411 = vmatpush.msra.mxu0 0.0
        %412 = vmatpush.msra.mxu0 0.0
        %413 = vmatpush.msra.mxu0 0.0
        %414 = vmatpush.msra.mxu0 0.0
        %415 = vmatpush.msra.mxu0 0.0
        %416 = vmatpush.msra.mxu0 0.0
        %417 = vmatpush.msra.mxu0 0.0
        %418 = vmatpush.msra.mxu0 0.0
        %419 = vmatpush.msra.mxu0 0.0
        %420 = vmatpush.msra.mxu0 0.0
        %421 = vmatpush.msra.mxu0 0.0
        %422 = vmatpush.msra.mxu0 %v405
        %423 = vmatmul.f32.gmra.mxu0 %v393
        %v424 = vpop.f32.mrf.mxu0
        %v425 = vadd.f32 0.0, %v424
        %426 = vmatmul.f32.gmra.mxu0 %v396
        %v427 = vpop.f32.mrf.mxu0
        %v428 = vadd.f32 0.0, %v427
        %429 = vmatmul.f32.gmra.mxu0 %v399
        %v430 = vpop.f32.mrf.mxu0
        %v431 = vadd.f32 0.0, %v430
        %432 = vmatmul.f32.gmra.mxu0 %v402
        %v433 = vpop.f32.mrf.mxu0
        %v434 = vadd.f32 0.0, %v433
        %435 = vdwg.mxu0
        %v437 = vsel %vm361, %v389, 0
        %439 = vmatpush.msra.mxu0 0.0
        %440 = vmatpush.msra.mxu0 0.0
        %441 = vmatpush.msra.mxu0 0.0
        %442 = vmatpush.msra.mxu0 0.0
        %443 = vmatpush.msra.mxu0 0.0
        %444 = vmatpush.msra.mxu0 0.0
        %445 = vmatpush.msra.mxu0 0.0
        %446 = vmatpush.msra.mxu0 0.0
        %447 = vmatpush.msra.mxu0 0.0
        %448 = vmatpush.msra.mxu0 0.0
        %449 = vmatpush.msra.mxu0 0.0
        %450 = vmatpush.msra.mxu0 0.0
        %451 = vmatpush.msra.mxu0 0.0
        %452 = vmatpush.msra.mxu0 0.0
        %453 = vmatpush.msra.mxu0 0.0
        %454 = vmatpush.msra.mxu0 %v437
        %455 = vmatmul.f32.gmra.mxu0 %v393
        %v456 = vpop.f32.mrf.mxu0
        %v457 = vadd.f32 0.0, %v456
        %458 = vmatmul.f32.gmra.mxu0 %v396
        %v459 = vpop.f32.mrf.mxu0
        %v460 = vadd.f32 0.0, %v459
        %461 = vmatmul.f32.gmra.mxu0 %v399
        %v462 = vpop.f32.mrf.mxu0
        %v463 = vadd.f32 0.0, %v462
        %464 = vmatmul.f32.gmra.mxu0 %v402
        %v465 = vpop.f32.mrf.mxu0
        %v466 = vadd.f32 0.0, %v465
        %467 = vdwg.mxu0
        %v468 = vmul.f32 %v457, %v385
        %v469 = vmul.f32 %v460, %v386
        %v470 = vmul.f32 %v463, %v387
        %v471 = vmul.f32 %v466, %v388
        %v472 = vsel %vm391, %v468, 0.0
        %473 = vadd.xlane.f32.xlu0 %v472
        %v474 = vpop.xlane.xlu0 %473
        %v475 = vsel %vm391, %v469, 0.0
        %476 = vadd.xlane.f32.xlu0 %v475
        %v477 = vpop.xlane.xlu0 %476
        %v478 = vsel %vm391, %v470, 0.0
        %479 = vadd.xlane.f32.xlu0 %v478
        %v480 = vpop.xlane.xlu0 %479
        %v481 = vsel %vm391, %v471, 0.0
        %482 = vadd.xlane.f32.xlu0 %v481
        %v483 = vpop.xlane.xlu0 %482
        %v484 = vadd.f32 %v425, %v428
        %v485 = vadd.f32 %v484, %v431
        %v486 = vadd.f32 %v485, %v434
        %v487 = vadd.f32 %v474, %v477
        %v488 = vadd.f32 %v487, %v480
        %v489 = vadd.f32 %v488, %v483
        %v490 = vrcp.pop 4096.0
        %v491 = vmul.f32 4096.0, %v490
        %v492 = vsub.f32 1.0, %v491
        %v493 = vmul.f32 %v490, %v492
        %v494 = vadd.f32 %v490, %v493
        %vm495 = vweird.f32 %v490
        %v496 = vsel %vm495, %v490, %v494
        %v497 = vmul.f32 %v486, %v496
        %v498 = vmul.f32 %v489, %v496
        %v499 = vmul.f32 %v497, %v497
        %v500 = vsub.f32 %v498, %v499
        %v501 = vmax.f32 %v500, 0.0
        %v502 = vadd.f32 %v501, 1e-05
        %v503 = vrsqrt.pop %v502
        %v504 = vmul.f32 %v503, %v502
        %v505 = vmul.f32 %v504, %v503
        %v506 = vmul.f32 0.5, %v505
        %v507 = vsub.f32 1.5, %v506
        %v508 = vmul.f32 %v503, %v507
        %vm509 = vweird.f32 %v502
        %vm510 = vweird.f32 %v503
        %vm511 = vmor %vm509, %vm510
        %v512 = vsel %vm511, %v503, %v508
        %v513 = vsub.f32 0.0, %v497
        %v514 = vmul.f32 %v513, %v512
        %516 = vrot.lane.b32.xlu0 %v514, 1
        %v517 = vpop.permute.xlu0 %516
        %vm519 = vcmask 7168
        %v520 = vsel %vm519, %v512, %v517
        %vm521 = vcmask 15360
        %522 = vst.msk [vmem:[%s169] sm:$0xff] %vm521, %v520
      $region36: #{tpu_custom_call.1} parent=27 // pred_fallthru
        _
      %p523 = scmp.lt.s32.totalorder %s17, 1
      %s524 = scalar_select %p523, %s17, 1
      %s525 = smul.addr %s524, 8
      %s526 = scalar_lea.vmem %s2, %s525
      // Predicated region
      $region37: #{tpu_custom_call.1} parent=27 // pred_check
        %p527 = pneg %p92
      $region38: #{tpu_custom_call.1} parent=27 // pred_check_branch
        %529 = sbr.rel (%p527) target = $region40
      $region39: #{tpu_custom_call.1} parent=27 // pred_region
        _
      $region40: #{tpu_custom_call.1} parent=27 // pred_fallthru
        _
    $region28: #{tpu_custom_call.1} parent=5 // pred_fallthru
      _
    %p530 = scmp.le.s32.totalorder 2, %s8
    // Predicated region
    $region41: #{tpu_custom_call.1} parent=5 // pred_check
      %p531 = pneg %p530
    $region42: #{tpu_custom_call.1} parent=5 // pred_check_branch
      %533 = sbr.rel (%p531) target = $region44
    $region43: #{tpu_custom_call.1} parent=5 // pred_region
      %s534 = ssub.s32 %s8, 2
      // Predicated region
      $region45: #{tpu_custom_call.1} parent=43 // pred_check
        %p535 = pneg %p98
      $region46: #{tpu_custom_call.1} parent=43 // pred_check_branch
        %537 = sbr.rel (%p535) target = $region48
      $region47: #{tpu_custom_call.1} parent=43 // pred_region
        %p538 = scmp.lt.s32.totalorder %s19, 1
        %s539 = scalar_select %p538, %s19, 1
        %s540 = smul.addr %s539, 8
        %s541 = scalar_lea.vmem %s2, %s540
      $region48: #{tpu_custom_call.1} parent=43 // pred_fallthru
        _
    $region44: #{tpu_custom_call.1} parent=5 // pred_fallthru
      _
  $region6: #{tpu_custom_call.1} parent=0 // loop_footer
    %s12 = sadd.s32 1, %s8
  $region7: #{tpu_custom_call.1} parent=0 // loop_footer_branch
    %7 = sbr.rel target = $region3
  $region8: #{tpu_custom_call.1} parent=0 // loop_exit
    _

// kernel: tpu_custom_call.1
$region0: #{tpu_custom_call.1}
  #allocation0 [shape = 'u32[]', space=smem, size = 0x4, offset = 0x4, fixed_abs, tag = 'smem constant byte address 0x4 - core index']
  #allocation1 [shape = 'u32[72,128]{1,0:T(1,128)}', space=vmem, size = 0x9000, scoped, tag = 'internal scratch']
  #allocation2 [shape = 'f32[4,4]{1,0:T(4,128)}', space=vmem, size = 0x800, scoped, tag = 'scratch operand']
  #allocation3 [shape = 'f32[4,1]{1,0:T(4,128)}', space=vmem, size = 0x800, scoped, tag = 'scratch operand']
  %s0 = inlined_call_operand.vmem [shape: bf16[2,4,1024], index: 0, kind: input, shape index: {}]
  %s1 = inlined_call_operand.vmem [shape: f32[32,4], index: 1, kind: input, shape index: {}]
  %s2 = inlined_call_operand.vmem [shape: f32[2,8,2], index: 2, kind: output, shape index: {}]
  %s3 = sld [smem:[#allocation0]]
  $region49: #{tpu_custom_call.1} parent=0
    _
  %s5 = ssub.s32 1, %s3
  %s6 = scalar_select 0, %s5, %s3
  loop: start=0, step=1, limit=4
  $region2: #{tpu_custom_call.1} parent=0 // loop_pre_header
    _
  $region3: #{tpu_custom_call.1} parent=0 // loop_header
    %s8 = sphi 0, %s12
    %p9 = scmp.ge.s32.totalorder %s8, 4
    %s15 = sphi 0, %s27
    %s16 = sphi 0, %s23
    %s17 = sphi 0, %s15
    %s18 = sphi 0, %s16
    %s19 = sphi 0, %s17
    %s20 = sphi 0, %s18
    %s32 = sphi 0, %s34
    %s35 = sphi 0, %s32
    %s36 = sphi 0, %s35
    %s52 = sphi 0, %s36
    %s56 = sphi 0, %s56
    %s58 = sphi 0, %s56
    %s59 = sphi 0, %s58
    %s73 = sphi 0, %s59
    %s79 = sphi 0, %s81
    %s82 = sphi 0, %s79
    %s83 = sphi 0, %s82
    %s99 = sphi 0, %s83
  $region4: #{tpu_custom_call.1} parent=0 // loop_header_branch
    %11 = sbr.rel (%p9) target = $region8
  $region5: #{tpu_custom_call.1} parent=0 // loop_body
    %s13 = ssub.s32 %s8, 1
    %s14 = ssub.s32 %s8, 2
    %s21 = sadd.s32 1, %s16
    %p22 = scmp.ge.s32.totalorder %s21, 1
    %s23 = scalar_select %p22, 0, %s21
    %s24 = sadd.s32 1, %s15
    %s25 = scalar_select %p22, %s24, %s15
    %p26 = scmp.ge.s32.totalorder %s25, 2
    %s27 = scalar_select %p26, 0, %s25
    %s28 = ssub.s32 %s15, %s27
    %s29 = ssub.s32 %s16, %s23
    %s30 = sor.u32 %s28, %s29
    %p31 = scmp.eq.s32.totalorder %s30, 0
    %s33 = sadd.s32 %s32, 1
    %s34 = scalar_select %p31, %s32, %s33
    %p37 = pneg %p31
    %p38 = scmp.eq.s32.totalorder %s8, 1
    %p39 = por %p37, %p38
    %p40 = scmp.ne.s32.totalorder %s32, %s35
    %p41 = scmp.eq.s32.totalorder %s8, 0
    %p42 = por %p40, %p41
    %p43 = scmp.ne.s32.totalorder %s32, %s35
    %p44 = scmp.eq.s32.totalorder %s13, 1
    %p45 = por %p43, %p44
    %p46 = scmp.ne.s32.totalorder %s35, %s36
    %p47 = scmp.eq.s32.totalorder %s13, 0
    %p48 = por %p46, %p47
    %p49 = scmp.ne.s32.totalorder %s35, %s36
    %p50 = scmp.eq.s32.totalorder %s14, 1
    %p51 = por %p49, %p50
    %p53 = scmp.ne.s32.totalorder %s36, %s52
    %p54 = scmp.eq.s32.totalorder %s14, 0
    %p55 = por %p53, %p54
    %s57 = sadd.s32 %s56, 1
    %p60 = scmp.eq.s32.totalorder %s8, 1
    %p61 = scmp.ne.s32.totalorder %s56, %s58
    %p62 = scmp.eq.s32.totalorder %s8, 0
    %p63 = por %p61, %p62
    %p64 = scmp.ne.s32.totalorder %s56, %s58
    %p65 = scmp.eq.s32.totalorder %s13, 1
    %p66 = por %p64, %p65
    %p67 = scmp.ne.s32.totalorder %s58, %s59
    %p68 = scmp.eq.s32.totalorder %s13, 0
    %p69 = por %p67, %p68
    %p70 = scmp.ne.s32.totalorder %s58, %s59
    %p71 = scmp.eq.s32.totalorder %s14, 1
    %p72 = por %p70, %p71
    %p74 = scmp.ne.s32.totalorder %s59, %s73
    %p75 = scmp.eq.s32.totalorder %s14, 0
    %p76 = por %p74, %p75
    %s77 = ssub.s32 %s15, %s27
    %p78 = scmp.eq.s32.totalorder %s77, 0
    %s80 = sadd.s32 %s79, 1
    %s81 = scalar_select %p78, %s79, %s80
    %p84 = pneg %p78
    %p85 = scmp.eq.s32.totalorder %s8, 1
    %p86 = por %p84, %p85
    %p87 = scmp.ne.s32.totalorder %s79, %s82
    %p88 = scmp.eq.s32.totalorder %s8, 0
    %p89 = por %p87, %p88
    %p90 = scmp.ne.s32.totalorder %s79, %s82
    %p91 = scmp.eq.s32.totalorder %s13, 1
    %p92 = por %p90, %p91
    %p93 = scmp.ne.s32.totalorder %s82, %s83
    %p94 = scmp.eq.s32.totalorder %s13, 0
    %p95 = por %p93, %p94
    %p96 = scmp.ne.s32.totalorder %s82, %s83
    %p97 = scmp.eq.s32.totalorder %s14, 1
    %p98 = por %p96, %p97
    %p100 = scmp.ne.s32.totalorder %s83, %s99
    %p101 = scmp.eq.s32.totalorder %s14, 0
    %p102 = por %p100, %p101
    %p103 = scmp.le.s32.totalorder 1, %s8
    %p104 = scmp.lt.s32.totalorder %s8, 3
    %p105 = pnand %p103, %p104
    %p106 = pneg %p105
    // Predicated region
    $region9: #{tpu_custom_call.1} parent=5 // pred_check
      _
    $region10: #{tpu_custom_call.1} parent=5 // pred_check_branch
      %108 = sbr.rel (%p105) target = $region12
    $region11: #{tpu_custom_call.1} parent=5 // pred_region
      %s109 = ssub.s32 %s8, 1
      // Predicated region
      $region13: #{tpu_custom_call.1} parent=11 // pred_check
        %p110 = pneg %p69
      $region14: #{tpu_custom_call.1} parent=11 // pred_check_branch
        %112 = sbr.rel (%p110) target = $region16
      $region15: #{tpu_custom_call.1} parent=11 // pred_region
        _
      $region16: #{tpu_custom_call.1} parent=11 // pred_fallthru
        _
    $region12: #{tpu_custom_call.1} parent=5 // pred_fallthru
      _
    %p113 = scmp.lt.s32.totalorder %s8, 2
    // Predicated region
    $region17: #{tpu_custom_call.1} parent=5 // pred_check
      %p114 = pneg %p113
    $region18: #{tpu_custom_call.1} parent=5 // pred_check_branch
      %116 = sbr.rel (%p114) target = $region20
    $region19: #{tpu_custom_call.1} parent=5 // pred_region
      // Predicated region
      $region21: #{tpu_custom_call.1} parent=19 // pred_check
        %p117 = pneg %p42
      $region22: #{tpu_custom_call.1} parent=19 // pred_check_branch
        %119 = sbr.rel (%p117) target = $region24
      $region23: #{tpu_custom_call.1} parent=19 // pred_region
        %s120 = smul.u32 8, %s16
        %p121 = scmp.lt.s32.totalorder %s15, 1
        %s122 = scalar_select %p121, %s15, 1
        %p123 = scmp.lt.s32.totalorder %s120, 7
        %s124 = scalar_select %p123, %s120, 7
        %s125 = smul.addr %s122, 8
        %s126 = sadd.s32 %s124, %s125
        %s127 = smul.addr %s126, 2
        %s128 = scalar_lea.vmem %s0, %s127
        %s129 = smul.u32 8, %s16
      $region24: #{tpu_custom_call.1} parent=19 // pred_fallthru
        _
    $region20: #{tpu_custom_call.1} parent=5 // pred_fallthru
      _
    %p130 = scmp.le.s32.totalorder 1, %s8
    %p131 = scmp.lt.s32.totalorder %s8, 3
    %p132 = pnand %p130, %p131
    %p133 = pneg %p132
    // Predicated region
    $region25: #{tpu_custom_call.1} parent=5 // pred_check
      _
    $region26: #{tpu_custom_call.1} parent=5 // pred_check_branch
      %135 = sbr.rel (%p132) target = $region28
    $region27: #{tpu_custom_call.1} parent=5 // pred_region
      %s136 = ssub.s32 %s8, 1
      %s137 = smul.u32 8, %s18
      %p138 = scmp.lt.s32.totalorder %s17, 1
      %s139 = scalar_select %p138, %s17, 1
      %p140 = scmp.lt.s32.totalorder %s137, 7
      %s141 = scalar_select %p140, %s137, 7
      %s142 = smul.addr %s139, 8
      %s143 = sadd.s32 %s141, %s142
      %s144 = smul.addr %s143, 2
      %s145 = scalar_lea.vmem %s0, %s144
      %p146 = pneg %p48
      %p147 = pneg %p45
      %p148 = pneg %p69
      %p149 = pneg %p66
      %p150 = pneg %p95
      %p151 = pneg %p92
      %p152 = scmp.lt.s32.totalorder %s17, 1
      %s153 = scalar_select %p152, %s17, 1
      %s154 = smul.addr %s153, 8
      %s155 = scalar_lea.vmem %s2, %s154
      %s156 = smul.u32 8, %s18
      %p157 = scmp.lt.s32.totalorder %s17, 1
      %s158 = scalar_select %p157, %s17, 1
      %p159 = scmp.lt.s32.totalorder %s156, 7
      %s160 = scalar_select %p159, %s156, 7
      %s161 = smul.addr %s158, 8
      %s162 = sadd.s32 %s160, %s161
      %s163 = smul.addr %s162, 2
      %s164 = scalar_lea.vmem %s0, %s163
      %s165 = smul.u32 8, %s18
      %p166 = scmp.lt.s32.totalorder %s17, 1
      %s167 = scalar_select %p166, %s17, 1
      %s168 = smul.addr %s167, 8
      %s169 = scalar_lea.vmem %s2, %s168
      %p171 = scmp.eq.s32.totalorder %s18, 0
      // Predicated region
      $region29: #{tpu_custom_call.1} parent=27 // pred_check
        %p172 = pneg %p171
      $region30: #{tpu_custom_call.1} parent=27 // pred_check_branch
        %174 = sbr.rel (%p172) target = $region32
      $region31: #{tpu_custom_call.1} parent=27 // pred_region
        %vm175 = vcmask 27648
        %176 = vst.msk [vmem:[#allocation2] sm:$0xf] %vm175, 0.0
        %vm177 = vcmask 3072
        %178 = vst.msk [vmem:[#allocation3] sm:$0xf] %vm177, 0.0
      $region32: #{tpu_custom_call.1} parent=27 // pred_fallthru
        _
      %v179 = vld [vmem:[%s164] sm:$0xff]
      %v180 = vld [vmem:[%s164 + $0x8] sm:$0xff]
      %v181 = vld [vmem:[#allocation2] sm:$0xf]
      %183 = vst [vmem:[#allocation1] ss:$4 sm:$0xff] %v179
      %s185 = scalar_lea.vmem [#allocation1], 32
      %186 = vst [vmem:[%s185] ss:$4 sm:$0xff] %v180
      %v187 = vld.sshfl [vmem:[#allocation1] sm:$0xff pattern:$0x73625140]
      %v188 = vld.sshfl [vmem:[#allocation1 + $0x8] sm:$0xff pattern:$0x73625140]
      %v189 = vld.sshfl [vmem:[#allocation1 + $0x10] sm:$0xff pattern:$0x73625140]
      %v190 = vld.sshfl [vmem:[#allocation1 + $0x18] sm:$0xff pattern:$0x73625140]
      %v191 = vld.sshfl [vmem:[#allocation1 + $0x20] sm:$0xff pattern:$0x73625140]
      %v192 = vld.sshfl [vmem:[#allocation1 + $0x28] sm:$0xff pattern:$0x73625140]
      %v193 = vld.sshfl [vmem:[#allocation1 + $0x30] sm:$0xff pattern:$0x73625140]
      %v194 = vld.sshfl [vmem:[#allocation1 + $0x38] sm:$0xff pattern:$0x73625140]
      %203 = vst [vmem:[#allocation1] ss:$4 sm:$0xff] %v179
      %s204 = scalar_lea.vmem [#allocation1], 32
      %205 = vst [vmem:[%s204] ss:$4 sm:$0xff] %v180
      %v206 = vld.sshfl [vmem:[#allocation1] sm:$0xff pattern:$0x73625140]
      %v207 = vld.sshfl [vmem:[#allocation1 + $0x8] sm:$0xff pattern:$0x73625140]
      %v208 = vld.sshfl [vmem:[#allocation1 + $0x10] sm:$0xff pattern:$0x73625140]
      %v209 = vld.sshfl [vmem:[#allocation1 + $0x18] sm:$0xff pattern:$0x73625140]
      %v210 = vld.sshfl [vmem:[#allocation1 + $0x20] sm:$0xff pattern:$0x73625140]
      %v211 = vld.sshfl [vmem:[#allocation1 + $0x28] sm:$0xff pattern:$0x73625140]
      %v212 = vld.sshfl [vmem:[#allocation1 + $0x30] sm:$0xff pattern:$0x73625140]
      %v213 = vld.sshfl [vmem:[#allocation1 + $0x38] sm:$0xff pattern:$0x73625140]
      %222 = vmatpush.bf16.xpose.msra.mxu0 0
      %223 = vmatpush.bf16.xpose.msra.mxu0 0
      %224 = vmatpush.bf16.xpose.msra.mxu0 0
      %225 = vmatpush.bf16.xpose.msra.mxu0 0
      %226 = vmatpush.bf16.xpose.msra.mxu0 0
      %227 = vmatpush.bf16.xpose.msra.mxu0 0
      %228 = vmatpush.bf16.xpose.msra.mxu0 0
      %229 = vmatpush.bf16.xpose.msra.mxu0 %v206
      %230 = vmatmul.bf16.gmra.mxu0 %v187
      %v231 = vpop.f32.mrf.mxu0
      %v232 = vadd.f32 0.0, %v231
      %v233 = vpop.f32.mrf.mxu0
      %234 = vdwg.mxu0
      %235 = vmatpush.bf16.xpose.msra.mxu0 0
      %236 = vmatpush.bf16.xpose.msra.mxu0 0
      %237 = vmatpush.bf16.xpose.msra.mxu0 0
      %238 = vmatpush.bf16.xpose.msra.mxu0 0
      %239 = vmatpush.bf16.xpose.msra.mxu0 0
      %240 = vmatpush.bf16.xpose.msra.mxu0 0
      %241 = vmatpush.bf16.xpose.msra.mxu0 0
      %242 = vmatpush.bf16.xpose.msra.mxu0 %v207
      %243 = vmatmul.bf16.gmra.mxu0 %v188
      %v244 = vpop.f32.mrf.mxu0
      %v245 = vadd.f32 %v232, %v244
      %v246 = vpop.f32.mrf.mxu0
      %247 = vdwg.mxu0
      %248 = vmatpush.bf16.xpose.msra.mxu0 0
      %249 = vmatpush.bf16.xpose.msra.mxu0 0
      %250 = vmatpush.bf16.xpose.msra.mxu0 0
      %251 = vmatpush.bf16.xpose.msra.mxu0 0
      %252 = vmatpush.bf16.xpose.msra.mxu0 0
      %253 = vmatpush.bf16.xpose.msra.mxu0 0
      %254 = vmatpush.bf16.xpose.msra.mxu0 0
      %255 = vmatpush.bf16.xpose.msra.mxu0 %v208
      %256 = vmatmul.bf16.gmra.mxu0 %v189
      %v257 = vpop.f32.mrf.mxu0
      %v258 = vadd.f32 %v245, %v257
      %v259 = vpop.f32.mrf.mxu0
      %260 = vdwg.mxu0
      %261 = vmatpush.bf16.xpose.msra.mxu0 0
      %262 = vmatpush.bf16.xpose.msra.mxu0 0
      %263 = vmatpush.bf16.xpose.msra.mxu0 0
      %264 = vmatpush.bf16.xpose.msra.mxu0 0
      %265 = vmatpush.bf16.xpose.msra.mxu0 0
      %266 = vmatpush.bf16.xpose.msra.mxu0 0
      %267 = vmatpush.bf16.xpose.msra.mxu0 0
      %268 = vmatpush.bf16.xpose.msra.mxu0 %v209
      %269 = vmatmul.bf16.gmra.mxu0 %v190
      %v270 = vpop.f32.mrf.mxu0
      %v271 = vadd.f32 %v258, %v270
      %v272 = vpop.f32.mrf.mxu0
      %273 = vdwg.mxu0
      %274 = vmatpush.bf16.xpose.msra.mxu0 0
      %275 = vmatpush.bf16.xpose.msra.mxu0 0
      %276 = vmatpush.bf16.xpose.msra.mxu0 0
      %277 = vmatpush.bf16.xpose.msra.mxu0 0
      %278 = vmatpush.bf16.xpose.msra.mxu0 0
      %279 = vmatpush.bf16.xpose.msra.mxu0 0
      %280 = vmatpush.bf16.xpose.msra.mxu0 0
      %281 = vmatpush.bf16.xpose.msra.mxu0 %v210
      %282 = vmatmul.bf16.gmra.mxu0 %v191
      %v283 = vpop.f32.mrf.mxu0
      %v284 = vadd.f32 %v271, %v283
      %v285 = vpop.f32.mrf.mxu0
      %286 = vdwg.mxu0
      %287 = vmatpush.bf16.xpose.msra.mxu0 0
      %288 = vmatpush.bf16.xpose.msra.mxu0 0
      %289 = vmatpush.bf16.xpose.msra.mxu0 0
      %290 = vmatpush.bf16.xpose.msra.mxu0 0
      %291 = vmatpush.bf16.xpose.msra.mxu0 0
      %292 = vmatpush.bf16.xpose.msra.mxu0 0
      %293 = vmatpush.bf16.xpose.msra.mxu0 0
      %294 = vmatpush.bf16.xpose.msra.mxu0 %v211
      %295 = vmatmul.bf16.gmra.mxu0 %v192
      %v296 = vpop.f32.mrf.mxu0
      %v297 = vadd.f32 %v284, %v296
      %v298 = vpop.f32.mrf.mxu0
      %299 = vdwg.mxu0
      %300 = vmatpush.bf16.xpose.msra.mxu0 0
      %301 = vmatpush.bf16.xpose.msra.mxu0 0
      %302 = vmatpush.bf16.xpose.msra.mxu0 0
      %303 = vmatpush.bf16.xpose.msra.mxu0 0
      %304 = vmatpush.bf16.xpose.msra.mxu0 0
      %305 = vmatpush.bf16.xpose.msra.mxu0 0
      %306 = vmatpush.bf16.xpose.msra.mxu0 0
      %307 = vmatpush.bf16.xpose.msra.mxu0 %v212
      %308 = vmatmul.bf16.gmra.mxu0 %v193
      %v309 = vpop.f32.mrf.mxu0
      %v310 = vadd.f32 %v297, %v309
      %v311 = vpop.f32.mrf.mxu0
      %312 = vdwg.mxu0
      %313 = vmatpush.bf16.xpose.msra.mxu0 0
      %314 = vmatpush.bf16.xpose.msra.mxu0 0
      %315 = vmatpush.bf16.xpose.msra.mxu0 0
      %316 = vmatpush.bf16.xpose.msra.mxu0 0
      %317 = vmatpush.bf16.xpose.msra.mxu0 0
      %318 = vmatpush.bf16.xpose.msra.mxu0 0
      %319 = vmatpush.bf16.xpose.msra.mxu0 0
      %320 = vmatpush.bf16.xpose.msra.mxu0 %v213
      %321 = vmatmul.bf16.gmra.mxu0 %v194
      %v322 = vpop.f32.mrf.mxu0
      %v323 = vadd.f32 %v310, %v322
      %v324 = vpop.f32.mrf.mxu0
      %325 = vdwg.mxu0
      %v326 = vadd.f32 %v181, %v323
      %vm327 = vcmask 27648
      %328 = vst.msk [vmem:[#allocation2] sm:$0xf] %vm327, %v326
      %v329 = vld [vmem:[#allocation3] sm:$0xf]
      %v330 = vunpack.c.l.bf16 %v179
      %v331 = vunpack.c.h.bf16 %v179
      %v332 = vunpack.c.l.bf16 %v180
      %v333 = vunpack.c.h.bf16 %v180
      %338 = vst [vmem:[#allocation1] ss:$2 sm:$0xff] %v330
      %s339 = scalar_lea.vmem [#allocation1], 16
      %340 = vst [vmem:[%s339] ss:$2 sm:$0xff] %v331
      %s341 = scalar_lea.vmem [#allocation1], 32
      %342 = vst [vmem:[%s341] ss:$2 sm:$0xff] %v332
      %s343 = scalar_lea.vmem [#allocation1], 48
      %344 = vst [vmem:[%s343] ss:$2 sm:$0xff] %v333
      %v345 = vld.sshfl [vmem:[#allocation1] sm:$0xff pattern:$0x75316420]
      %v346 = vld.sshfl [vmem:[#allocation1 + $0x8] sm:$0xff pattern:$0x75316420]
      %v347 = vld.sshfl [vmem:[#allocation1 + $0x10] sm:$0xff pattern:$0x75316420]
      %v348 = vld.sshfl [vmem:[#allocation1 + $0x18] sm:$0xff pattern:$0x75316420]
      %v349 = vld.sshfl [vmem:[#allocation1 + $0x20] sm:$0xff pattern:$0x75316420]
      %v350 = vld.sshfl [vmem:[#allocation1 + $0x28] sm:$0xff pattern:$0x75316420]
      %v351 = vld.sshfl [vmem:[#allocation1 + $0x30] sm:$0xff pattern:$0x75316420]
      %v352 = vld.sshfl [vmem:[#allocation1 + $0x38] sm:$0xff pattern:$0x75316420]
      %vm361 = vcmask 1043456
      %v362 = vsel %vm361, %v345, 0.0
      %v363 = vsel %vm361, %v346, 0.0
      %v364 = vadd.f32 %v362, %v363
      %v365 = vsel %vm361, %v347, 0.0
      %v366 = vadd.f32 %v364, %v365
      %v367 = vsel %vm361, %v348, 0.0
      %v368 = vadd.f32 %v366, %v367
      %v369 = vsel %vm361, %v349, 0.0
      %v370 = vadd.f32 %v368, %v369
      %v371 = vsel %vm361, %v350, 0.0
      %v372 = vadd.f32 %v370, %v371
      %v373 = vsel %vm361, %v351, 0.0
      %v374 = vadd.f32 %v372, %v373
      %v375 = vsel %vm361, %v352, 0.0
      %v376 = vadd.f32 %v374, %v375
      %377 = vadd.xlane.f32.xlu0 %v376
      %v378 = vpop.xlane.xlu0 %377
      %v379 = vadd.f32 %v329, %v378
      %vm380 = vcmask 3072
      %381 = vst.msk [vmem:[#allocation3] sm:$0xf] %vm380, %v379
      // Predicated region
      $region33: #{tpu_custom_call.1} parent=27 // pred_check
        %p382 = pneg %p171
      $region34: #{tpu_custom_call.1} parent=27 // pred_check_branch
        %384 = sbr.rel (%p382) target = $region36
      $region35: #{tpu_custom_call.1} parent=27 // pred_region
        %v385 = vld [vmem:[%s1] sm:$0xff]
        %v386 = vld [vmem:[%s1 + $0x8] sm:$0xff]
        %v387 = vld [vmem:[%s1 + $0x10] sm:$0xff]
        %v388 = vld [vmem:[%s1 + $0x18] sm:$0xff]
        %v389 = vld [vmem:[#allocation2] sm:$0xf]
        %v390 = vld [vmem:[#allocation3] sm:$0xf]
        %vm391 = vcmask 31744
        %v393 = vsel %vm391, %v385, 0
        %v396 = vsel %vm391, %v386, 0
        %v399 = vsel %vm391, %v387, 0
        %v402 = vsel %vm391, %v388, 0
        %v405 = vsel %vm361, %v390, 0
        %407 = vmatpush.msra.mxu0 0.0
        %408 = vmatpush.msra.mxu0 0.0
        %409 = vmatpush.msra.mxu0 0.0
        %410 = vmatpush.msra.mxu0 0.0
        %411 = vmatpush.msra.mxu0 0.0
        %412 = vmatpush.msra.mxu0 0.0
        %413 = vmatpush.msra.mxu0 0.0
        %414 = vmatpush.msra.mxu0 0.0
        %415 = vmatpush.msra.mxu0 0.0
        %416 = vmatpush.msra.mxu0 0.0
        %417 = vmatpush.msra.mxu0 0.0
        %418 = vmatpush.msra.mxu0 0.0
        %419 = vmatpush.msra.mxu0 0.0
        %420 = vmatpush.msra.mxu0 0.0
        %421 = vmatpush.msra.mxu0 0.0
        %422 = vmatpush.msra.mxu0 %v405
        %423 = vmatmul.f32.gmra.mxu0 %v393
        %v424 = vpop.f32.mrf.mxu0
        %v425 = vadd.f32 0.0, %v424
        %426 = vmatmul.f32.gmra.mxu0 %v396
        %v427 = vpop.f32.mrf.mxu0
        %v428 = vadd.f32 0.0, %v427
        %429 = vmatmul.f32.gmra.mxu0 %v399
        %v430 = vpop.f32.mrf.mxu0
        %v431 = vadd.f32 0.0, %v430
        %432 = vmatmul.f32.gmra.mxu0 %v402
        %v433 = vpop.f32.mrf.mxu0
        %v434 = vadd.f32 0.0, %v433
        %435 = vdwg.mxu0
        %v437 = vsel %vm361, %v389, 0
        %439 = vmatpush.msra.mxu0 0.0
        %440 = vmatpush.msra.mxu0 0.0
        %441 = vmatpush.msra.mxu0 0.0
        %442 = vmatpush.msra.mxu0 0.0
        %443 = vmatpush.msra.mxu0 0.0
        %444 = vmatpush.msra.mxu0 0.0
        %445 = vmatpush.msra.mxu0 0.0
        %446 = vmatpush.msra.mxu0 0.0
        %447 = vmatpush.msra.mxu0 0.0
        %448 = vmatpush.msra.mxu0 0.0
        %449 = vmatpush.msra.mxu0 0.0
        %450 = vmatpush.msra.mxu0 0.0
        %451 = vmatpush.msra.mxu0 0.0
        %452 = vmatpush.msra.mxu0 0.0
        %453 = vmatpush.msra.mxu0 0.0
        %454 = vmatpush.msra.mxu0 %v437
        %455 = vmatmul.f32.gmra.mxu0 %v393
        %v456 = vpop.f32.mrf.mxu0
        %v457 = vadd.f32 0.0, %v456
        %458 = vmatmul.f32.gmra.mxu0 %v396
        %v459 = vpop.f32.mrf.mxu0
        %v460 = vadd.f32 0.0, %v459
        %461 = vmatmul.f32.gmra.mxu0 %v399
        %v462 = vpop.f32.mrf.mxu0
        %v463 = vadd.f32 0.0, %v462
        %464 = vmatmul.f32.gmra.mxu0 %v402
        %v465 = vpop.f32.mrf.mxu0
        %v466 = vadd.f32 0.0, %v465
        %467 = vdwg.mxu0
        %v468 = vmul.f32 %v457, %v385
        %v469 = vmul.f32 %v460, %v386
        %v470 = vmul.f32 %v463, %v387
        %v471 = vmul.f32 %v466, %v388
        %v472 = vsel %vm391, %v468, 0.0
        %473 = vadd.xlane.f32.xlu0 %v472
        %v474 = vpop.xlane.xlu0 %473
        %v475 = vsel %vm391, %v469, 0.0
        %476 = vadd.xlane.f32.xlu0 %v475
        %v477 = vpop.xlane.xlu0 %476
        %v478 = vsel %vm391, %v470, 0.0
        %479 = vadd.xlane.f32.xlu0 %v478
        %v480 = vpop.xlane.xlu0 %479
        %v481 = vsel %vm391, %v471, 0.0
        %482 = vadd.xlane.f32.xlu0 %v481
        %v483 = vpop.xlane.xlu0 %482
        %v484 = vadd.f32 %v425, %v428
        %v485 = vadd.f32 %v484, %v431
        %v486 = vadd.f32 %v485, %v434
        %v487 = vadd.f32 %v474, %v477
        %v488 = vadd.f32 %v487, %v480
        %v489 = vadd.f32 %v488, %v483
        %v490 = vrcp.pop 4096.0
        %v491 = vmul.f32 4096.0, %v490
        %v492 = vsub.f32 1.0, %v491
        %v493 = vmul.f32 %v490, %v492
        %v494 = vadd.f32 %v490, %v493
        %vm495 = vweird.f32 %v490
        %v496 = vsel %vm495, %v490, %v494
        %v497 = vmul.f32 %v486, %v496
        %v498 = vmul.f32 %v489, %v496
        %v499 = vmul.f32 %v497, %v497
        %v500 = vsub.f32 %v498, %v499
        %v501 = vmax.f32 %v500, 0.0
        %v502 = vadd.f32 %v501, 1e-05
        %v503 = vrsqrt.pop %v502
        %v504 = vmul.f32 %v503, %v502
        %v505 = vmul.f32 %v504, %v503
        %v506 = vmul.f32 0.5, %v505
        %v507 = vsub.f32 1.5, %v506
        %v508 = vmul.f32 %v503, %v507
        %vm509 = vweird.f32 %v502
        %vm510 = vweird.f32 %v503
        %vm511 = vmor %vm509, %vm510
        %v512 = vsel %vm511, %v503, %v508
        %v513 = vsub.f32 0.0, %v497
        %v514 = vmul.f32 %v513, %v512
        %516 = vrot.lane.b32.xlu0 %v514, 1
        %v517 = vpop.permute.xlu0 %516
        %vm519 = vcmask 7168
        %v520 = vsel %vm519, %v512, %v517
        %vm521 = vcmask 15360
        %522 = vst.msk [vmem:[%s169] sm:$0xff] %vm521, %v520
      $region36: #{tpu_custom_call.1} parent=27 // pred_fallthru
        _
      %p523 = scmp.lt.s32.totalorder %s17, 1
      %s524 = scalar_select %p523, %s17, 1
      %s525 = smul.addr %s524, 8
      %s526 = scalar_lea.vmem %s2, %s525
      // Predicated region
      $region37: #{tpu_custom_call.1} parent=27 // pred_check
        %p527 = pneg %p92
      $region38: #{tpu_custom_call.1} parent=27 // pred_check_branch
        %529 = sbr.rel (%p527) target = $region40
      $region39: #{tpu_custom_call.1} parent=27 // pred_region
        _
      $region40: #{tpu_custom_call.1} parent=27 // pred_fallthru
        _
    $region28: #{tpu_custom_call.1} parent=5 // pred_fallthru
      _
    %p530 = scmp.le.s32.totalorder 2, %s8
    // Predicated region
    $region41: #{tpu_custom_call.1} parent=5 // pred_check
      %p531 = pneg %p530
    $region42: #{tpu_custom_call.1} parent=5 // pred_check_branch
      %533 = sbr.rel (%p531) target = $region44
    $region43: #{tpu_custom_call.1} parent=5 // pred_region
      %s534 = ssub.s32 %s8, 2
      // Predicated region
      $region45: #{tpu_custom_call.1} parent=43 // pred_check
        %p535 = pneg %p98
      $region46: #{tpu_custom_call.1} parent=43 // pred_check_branch
        %537 = sbr.rel (%p535) target = $region48
      $region47: #{tpu_custom_call.1} parent=43 // pred_region
        %p538 = scmp.lt.s32.totalorder %s19, 1
        %s539 = scalar_select %p538, %s19, 1
        %s540 = smul.addr %s539, 8
        %s541 = scalar_lea.vmem %s2, %s540
      $region48: #{tpu_custom_call.1} parent=43 // pred_fallthru
        _
    $region44: #{tpu_custom_call.1} parent=5 // pred_fallthru
      _
  $region6: #{tpu_custom_call.1} parent=0 // loop_footer
    %s12 = sadd.s32 1, %s8
  $region7: #{tpu_custom_call.1} parent=0 // loop_footer_branch
    %7 = sbr.rel target = $region3
  $region8: #{tpu_custom_call.1} parent=0 // loop_exit
    _

</llo_original>
